<compile_context>
chip_gen: v6e
topology: v6e:2x2x1
jax: 0.10.0
libtpu: 0.0.40
codegen_flags: <defaults>
</compile_context>

<pallas_src>
import jax
import jax.numpy as jnp
from jax.experimental import pallas as pl
from jax.experimental.pallas import tpu as pltpu

SEQ_LEN = 5
NUM_INPUT_FEATURE = 2
NUM_JOINT = 7
HIDDEN = 200

COND_DIM = (SEQ_LEN - 1) * NUM_INPUT_FEATURE * NUM_JOINT   # 56
INPUT_DIM = NUM_JOINT                                      # 7
STATE_DIM = NUM_INPUT_FEATURE * NUM_JOINT                  # 14
FWD_IN = COND_DIM + INPUT_DIM                              # 63
BWD_IN = COND_DIM + STATE_DIM                              # 70
FWD_OUT = NUM_INPUT_FEATURE * NUM_JOINT                    # 14
BWD_OUT = NUM_JOINT                                        # 7

TOTAL_OUT = FWD_OUT + BWD_OUT + BWD_OUT + FWD_OUT          # 42
OUT_PAD = 128                                              # lane-dense output width


def _panda_cycle_kernel(cond_ref, state_ref, inp_ref,
                        w1f_c_ref, w1f_x_ref, b1f_ref, w2f_ref, b2f_ref,
                        w3f_ref, b3f_ref,
                        w1b_c_ref, w1b_x_ref, b1b_ref, w2b_ref, b2b_ref,
                        w3b_ref, b3b_ref,
                        out_ref):
    cond = cond_ref[...]                             # (bb, 56)
    bb = cond.shape[0]

    # Shared condition contribution to layer 1 of each net: computed exactly
    # once and reused by both invocations of that net.
    cond_f = (jnp.dot(cond, w1f_c_ref[...], preferred_element_type=jnp.float32)
              + b1f_ref[...])                        # (bb, 200)
    cond_b = (jnp.dot(cond, w1b_c_ref[...], preferred_element_type=jnp.float32)
              + b1b_ref[...])                        # (bb, 200)

    # TODO(synk): optional bf16-operand MXU path (f32 accumulation) would give
    # ~2x MXU throughput but needs a relaxed reference tolerance; kept f32.
    def forward_tail(tail):                          # tail: (bb, 7) or (bb, 14)
        h = jnp.maximum(
            cond_f + jnp.dot(tail, w1f_x_ref[...],
                             preferred_element_type=jnp.float32), 0.0)
        h = jnp.maximum(
            jnp.dot(h, w2f_ref[...], preferred_element_type=jnp.float32)
            + b2f_ref[...], 0.0)
        return (jnp.dot(h, w3f_ref[...], preferred_element_type=jnp.float32)
                + b3f_ref[...])                      # (bb, 14)

    # Pass 1: forward_net(condition, input)
    fwd = forward_tail(inp_ref[...])                 # (bb, 14)

    # Pass 2: backward_net on [state; fwd] stacked along M -> bwd and fb in a
    # single 3-layer pass (2*bb rows). cond_b is added via a zero-copy sublane
    # split reshape (bb is a multiple of 8) + broadcast — no (bb,200) copy.
    tail_b = jnp.concatenate([state_ref[...], fwd], axis=0)            # (2*bb, 14)
    t = jnp.dot(tail_b, w1b_x_ref[...], preferred_element_type=jnp.float32)
    h = jnp.maximum(t.reshape(2, bb, HIDDEN) + cond_b[None], 0.0)
    h = h.reshape(2 * bb, HIDDEN)
    h = jnp.maximum(
        jnp.dot(h, w2b_ref[...], preferred_element_type=jnp.float32)
        + b2b_ref[...], 0.0)
    out_b = (jnp.dot(h, w3b_ref[...], preferred_element_type=jnp.float32)
             + b3b_ref[...])                         # (2*bb, 7)
    bwd = out_b[:bb]                                 # backward_net(cond, state)
    fb = out_b[bb:]                                  # backward_net(cond, fwd)

    # Pass 3: forward_net(condition, backward_output)
    bf = forward_tail(bwd)                           # (bb, 14)

    # Lane-dense output: pack [fwd | bwd | fb | bf] and zero-pad to 128 lanes
    # so the writeback is one unmasked full-lane store per row group.
    packed = jnp.concatenate([fwd, bwd, fb, bf], axis=1)               # (bb, 42)
    pad = jnp.zeros((bb, OUT_PAD - TOTAL_OUT), dtype=packed.dtype)
    out_ref[...] = jnp.concatenate([packed, pad], axis=1).astype(out_ref.dtype)


def _round_up(x, m):
    return (x + m - 1) // m * m


def _choose_block_b(B, max_block_b):
    # Split the batch into >= 2 roughly-equal tiles when possible (so the
    # "parallel" batch axis can shard across both TensorCores on v7x) and into
    # cdiv(B, max_block_b) tiles when B is large; round each tile up to the
    # sublane multiple of 8. Avoids ~2x padded compute when B is just over a
    # tile multiple (e.g. B=300 -> bb=152, not 512 of work).
    n_steps = max(pl.cdiv(B, max_block_b), 2)
    bb = _round_up(pl.cdiv(B, n_steps), 8)
    bb = min(bb, max_block_b, _round_up(B, 8))
    return max(bb, 8)


def panda_cycle_forward(condition, state, inp, params, *, max_block_b=1024):
    """Returns (forward, backward, forward_backward, backward_forward)."""
    B = condition.shape[0]
    condition = condition.astype(jnp.float32)
    state = state.astype(jnp.float32)
    inp = inp.astype(jnp.float32)

    bb = _choose_block_b(B, max_block_b)
    grid = (pl.cdiv(B, bb),)
    # Partial last block: Pallas pads the input window (garbage rows), but the
    # computation is row-independent and the out-of-bounds output rows are
    # never written back, so no wrapper-side jnp.pad is needed.

    # Pre-split layer-1 weights in the wrapper (zero-cost at JAX level) so the
    # kernel sees clean, full-array operands.
    w1f_c, w1f_x = params["w1f"][:COND_DIM], params["w1f"][COND_DIM:]
    w1b_c, w1b_x = params["w1b"][:COND_DIM], params["w1b"][COND_DIM:]
    weights = (w1f_c, w1f_x, params["b1f"], params["w2f"], params["b2f"],
               params["w3f"], params["b3f"],
               w1b_c, w1b_x, params["b1b"], params["w2b"], params["b2b"],
               params["w3b"], params["b3b"])

    in_specs = [pl.BlockSpec((bb, COND_DIM), lambda i: (i, 0)),
                pl.BlockSpec((bb, STATE_DIM), lambda i: (i, 0)),
                pl.BlockSpec((bb, INPUT_DIM), lambda i: (i, 0))]
    # Weights: constant index_map -> VMEM-resident across batch iterations.
    in_specs += [pl.BlockSpec(w.shape, lambda i: (0, 0)) for w in weights]
    out_spec = pl.BlockSpec((bb, OUT_PAD), lambda i: (i, 0))

    packed_out = pl.pallas_call(
        _panda_cycle_kernel,
        out_shape=jax.ShapeDtypeStruct((B, OUT_PAD), jnp.float32),
        grid=grid,
        in_specs=in_specs,
        out_specs=out_spec,
        compiler_params=pltpu.CompilerParams(
            dimension_semantics=("parallel",),        # batch-parallel (v7x 2-TC)
            vmem_limit_bytes=48 * 1024 * 1024),       # big-tile headroom (v5e)
    )(condition, state, inp, *weights)

    fwd = packed_out[:, :FWD_OUT]
    bwd = packed_out[:, FWD_OUT:FWD_OUT + BWD_OUT]
    fb = packed_out[:, FWD_OUT + BWD_OUT:FWD_OUT + 2 * BWD_OUT]
    bf = packed_out[:, FWD_OUT + 2 * BWD_OUT:TOTAL_OUT]
    return fwd, bwd, fb, bf


def init_params(key):
    """Deterministic init mimicking nn.Linear shapes; weights stored (in, out)."""
    def linear(key, fan_in, fan_out):
        kw, kb = jax.random.split(key)
        bound = 1.0 / jnp.sqrt(float(fan_in))
        w = jax.random.uniform(kw, (fan_in, fan_out), jnp.float32, -bound, bound)
        b = jax.random.uniform(kb, (1, fan_out), jnp.float32, -bound, bound)
        return w, b

    keys = jax.random.split(key, 6)
    w1f, b1f = linear(keys[0], FWD_IN, HIDDEN)
    w2f, b2f = linear(keys[1], HIDDEN, HIDDEN)
    w3f, b3f = linear(keys[2], HIDDEN, FWD_OUT)
    w1b, b1b = linear(keys[3], BWD_IN, HIDDEN)
    w2b, b2b = linear(keys[4], HIDDEN, HIDDEN)
    w3b, b3b = linear(keys[5], HIDDEN, BWD_OUT)
    return dict(w1f=w1f, b1f=b1f, w2f=w2f, b2f=b2f, w3f=w3f, b3f=b3f,
                w1b=w1b, b1b=b1b, w2b=w2b, b2b=b2b, w3b=w3b, b3b=b3b)


def reference_forward(condition, state, inp, p):
    def mlp(x, w1, b1, w2, b2, w3, b3):
        h = jnp.maximum(x @ w1 + b1, 0.0)
        h = jnp.maximum(h @ w2 + b2, 0.0)
        return h @ w3 + b3

    fwd = mlp(jnp.concatenate([condition, inp], axis=1),
              p["w1f"], p["b1f"], p["w2f"], p["b2f"], p["w3f"], p["b3f"])
    bwd = mlp(jnp.concatenate([condition, state], axis=1),
              p["w1b"], p["b1b"], p["w2b"], p["b2b"], p["w3b"], p["b3b"])
    fb = mlp(jnp.concatenate([condition, fwd], axis=1),
             p["w1b"], p["b1b"], p["w2b"], p["b2b"], p["w3b"], p["b3b"])
    bf = mlp(jnp.concatenate([condition, bwd], axis=1),
             p["w1f"], p["b1f"], p["w2f"], p["b2f"], p["w3f"], p["b3f"])
    return fwd, bwd, fb, bf


def _check(condition, state, inp, params, **kw):
    outs = panda_cycle_forward(condition, state, inp, params, **kw)
    outs = jax.block_until_ready(outs)
    refs = reference_forward(condition, state, inp, params)
    for o, r in zip(outs, refs):
        assert o.shape == r.shape, (o.shape, r.shape)
        assert jnp.allclose(o, r, atol=1e-4, rtol=1e-4), "mismatch vs reference"


if __name__ == "__main__":
    key = jax.random.PRNGKey(0)
    k_cond, k_state, k_inp, k_params = jax.random.split(key, 4)
    params = init_params(k_params)

    # Main small-shape test (B = 8, single grid step).
    B = 8
    condition = jax.random.normal(k_cond, (B, COND_DIM), jnp.float32)
    state = jax.random.normal(k_state, (B, STATE_DIM), jnp.float32)
    inp = jax.random.normal(k_inp, (B, INPUT_DIM), jnp.float32)
    _check(condition, state, inp, params)

    # Exercise the batch grid + partial-last-block path (grid of 2 tiles,
    # B not a multiple of the tile; no wrapper-side padding).
    B2 = 12
    condition2 = jax.random.normal(k_cond, (B2, COND_DIM), jnp.float32)
    state2 = jax.random.normal(k_state, (B2, STATE_DIM), jnp.float32)
    inp2 = jax.random.normal(k_inp, (B2, INPUT_DIM), jnp.float32)
    _check(condition2, state2, inp2, params, max_block_b=8)

    # Exercise the even-split tile selection (B=200 -> bb=104, grid=2, last
    # block partially out of bounds) with the default large-tile settings.
    B3 = 200
    condition3 = jax.random.normal(k_cond, (B3, COND_DIM), jnp.float32)
    state3 = jax.random.normal(k_state, (B3, STATE_DIM), jnp.float32)
    inp3 = jax.random.normal(k_inp, (B3, INPUT_DIM), jnp.float32)
    _check(condition3, state3, inp3, params)

    print("KERNEL_OK")
</pallas_src>

<mosaic_0001>
module attributes {stable_mosaic.version = 11 : i64} {
  func.func @_panda_cycle_kernel(%arg0: i32, %arg1: memref<8x56xf32, #tpu.memory_space<vmem>>, %arg2: memref<8x14xf32, #tpu.memory_space<vmem>>, %arg3: memref<8x7xf32, #tpu.memory_space<vmem>>, %arg4: memref<56x200xf32, #tpu.memory_space<vmem>>, %arg5: memref<7x200xf32, #tpu.memory_space<vmem>>, %arg6: memref<1x200xf32, #tpu.memory_space<vmem>>, %arg7: memref<200x200xf32, #tpu.memory_space<vmem>>, %arg8: memref<1x200xf32, #tpu.memory_space<vmem>>, %arg9: memref<200x14xf32, #tpu.memory_space<vmem>>, %arg10: memref<1x14xf32, #tpu.memory_space<vmem>>, %arg11: memref<56x200xf32, #tpu.memory_space<vmem>>, %arg12: memref<14x200xf32, #tpu.memory_space<vmem>>, %arg13: memref<1x200xf32, #tpu.memory_space<vmem>>, %arg14: memref<200x200xf32, #tpu.memory_space<vmem>>, %arg15: memref<1x200xf32, #tpu.memory_space<vmem>>, %arg16: memref<200x7xf32, #tpu.memory_space<vmem>>, %arg17: memref<1x7xf32, #tpu.memory_space<vmem>>, %arg18: memref<8x128xf32, #tpu.memory_space<vmem>>) attributes {dimension_semantics = [#tpu.dimension_semantics<parallel>], iteration_bounds = array<i64: 1>, scalar_prefetch = 0 : i64, scratch_operands = 0 : i64, tpu.core_type = #tpu.core_type<tc>, window_params = [{transform_indices = @transform_0, window_bounds = array<i64: 8, 56>}, {transform_indices = @transform_1, window_bounds = array<i64: 8, 14>}, {transform_indices = @transform_2, window_bounds = array<i64: 8, 7>}, {pipeline_mode = #tpu.pipeline_mode<synchronous>, transform_indices = @transform_3, window_bounds = array<i64: 56, 200>}, {pipeline_mode = #tpu.pipeline_mode<synchronous>, transform_indices = @transform_4, window_bounds = array<i64: 7, 200>}, {pipeline_mode = #tpu.pipeline_mode<synchronous>, transform_indices = @transform_5, window_bounds = array<i64: 1, 200>}, {pipeline_mode = #tpu.pipeline_mode<synchronous>, transform_indices = @transform_6, window_bounds = array<i64: 200, 200>}, {pipeline_mode = #tpu.pipeline_mode<synchronous>, transform_indices = @transform_7, window_bounds = array<i64: 1, 200>}, {pipeline_mode = #tpu.pipeline_mode<synchronous>, transform_indices = @transform_8, window_bounds = array<i64: 200, 14>}, {pipeline_mode = #tpu.pipeline_mode<synchronous>, transform_indices = @transform_9, window_bounds = array<i64: 1, 14>}, {pipeline_mode = #tpu.pipeline_mode<synchronous>, transform_indices = @transform_10, window_bounds = array<i64: 56, 200>}, {pipeline_mode = #tpu.pipeline_mode<synchronous>, transform_indices = @transform_11, window_bounds = array<i64: 14, 200>}, {pipeline_mode = #tpu.pipeline_mode<synchronous>, transform_indices = @transform_12, window_bounds = array<i64: 1, 200>}, {pipeline_mode = #tpu.pipeline_mode<synchronous>, transform_indices = @transform_13, window_bounds = array<i64: 200, 200>}, {pipeline_mode = #tpu.pipeline_mode<synchronous>, transform_indices = @transform_14, window_bounds = array<i64: 1, 200>}, {pipeline_mode = #tpu.pipeline_mode<synchronous>, transform_indices = @transform_15, window_bounds = array<i64: 200, 7>}, {pipeline_mode = #tpu.pipeline_mode<synchronous>, transform_indices = @transform_16, window_bounds = array<i64: 1, 7>}, {transform_indices = @transform_17, window_bounds = array<i64: 8, 128>}]} {
    %c0 = arith.constant 0 : index
    %c0_0 = arith.constant 0 : index
    %0 = vector.load %arg1[%c0, %c0_0] : memref<8x56xf32, #tpu.memory_space<vmem>>, vector<8x56xf32>
    %c0_1 = arith.constant 0 : index
    %c0_2 = arith.constant 0 : index
    %1 = vector.load %arg4[%c0_1, %c0_2] : memref<56x200xf32, #tpu.memory_space<vmem>>, vector<56x200xf32>
    %cst = arith.constant dense<0.000000e+00> : vector<8x200xf32>
    %2 = tpu.matmul %0, %1, %cst {dimension_numbers = #tpu.dot_dimension_numbers<[1], [0], [0], [1], [0, 0, 1, 1], [], []>} : vector<8x56xf32>, vector<56x200xf32>, vector<8x200xf32> -> vector<8x200xf32>
    %c0_3 = arith.constant 0 : index
    %c0_4 = arith.constant 0 : index
    %3 = vector.load %arg6[%c0_3, %c0_4] : memref<1x200xf32, #tpu.memory_space<vmem>>, vector<1x200xf32>
    %4 = vector.broadcast %3 : vector<1x200xf32> to vector<8x200xf32>
    %5 = arith.addf %2, %4 : vector<8x200xf32>
    %c0_5 = arith.constant 0 : index
    %c0_6 = arith.constant 0 : index
    %6 = vector.load %arg11[%c0_5, %c0_6] : memref<56x200xf32, #tpu.memory_space<vmem>>, vector<56x200xf32>
    %cst_7 = arith.constant dense<0.000000e+00> : vector<8x200xf32>
    %7 = tpu.matmul %0, %6, %cst_7 {dimension_numbers = #tpu.dot_dimension_numbers<[1], [0], [0], [1], [0, 0, 1, 1], [], []>} : vector<8x56xf32>, vector<56x200xf32>, vector<8x200xf32> -> vector<8x200xf32>
    %c0_8 = arith.constant 0 : index
    %c0_9 = arith.constant 0 : index
    %8 = vector.load %arg13[%c0_8, %c0_9] : memref<1x200xf32, #tpu.memory_space<vmem>>, vector<1x200xf32>
    %9 = vector.broadcast %8 : vector<1x200xf32> to vector<8x200xf32>
    %10 = arith.addf %7, %9 : vector<8x200xf32>
    %c0_10 = arith.constant 0 : index
    %c0_11 = arith.constant 0 : index
    %11 = vector.load %arg3[%c0_10, %c0_11] : memref<8x7xf32, #tpu.memory_space<vmem>>, vector<8x7xf32>
    %c0_12 = arith.constant 0 : index
    %c0_13 = arith.constant 0 : index
    %12 = vector.load %arg5[%c0_12, %c0_13] : memref<7x200xf32, #tpu.memory_space<vmem>>, vector<7x200xf32>
    %cst_14 = arith.constant dense<0.000000e+00> : vector<8x200xf32>
    %13 = tpu.matmul %11, %12, %cst_14 {dimension_numbers = #tpu.dot_dimension_numbers<[1], [0], [0], [1], [0, 0, 1, 1], [], []>} : vector<8x7xf32>, vector<7x200xf32>, vector<8x200xf32> -> vector<8x200xf32>
    %14 = arith.addf %5, %13 : vector<8x200xf32>
    %cst_15 = arith.constant 0.000000e+00 : f32
    %15 = vector.broadcast %cst_15 : f32 to vector<8x200xf32>
    %16 = arith.maximumf %14, %15 : vector<8x200xf32>
    %c0_16 = arith.constant 0 : index
    %c0_17 = arith.constant 0 : index
    %17 = vector.load %arg7[%c0_16, %c0_17] : memref<200x200xf32, #tpu.memory_space<vmem>>, vector<200x200xf32>
    %cst_18 = arith.constant dense<0.000000e+00> : vector<8x200xf32>
    %18 = tpu.matmul %16, %17, %cst_18 {dimension_numbers = #tpu.dot_dimension_numbers<[1], [0], [0], [1], [0, 0, 1, 1], [], []>} : vector<8x200xf32>, vector<200x200xf32>, vector<8x200xf32> -> vector<8x200xf32>
    %c0_19 = arith.constant 0 : index
    %c0_20 = arith.constant 0 : index
    %19 = vector.load %arg8[%c0_19, %c0_20] : memref<1x200xf32, #tpu.memory_space<vmem>>, vector<1x200xf32>
    %20 = vector.broadcast %19 : vector<1x200xf32> to vector<8x200xf32>
    %21 = arith.addf %18, %20 : vector<8x200xf32>
    %cst_21 = arith.constant 0.000000e+00 : f32
    %22 = vector.broadcast %cst_21 : f32 to vector<8x200xf32>
    %23 = arith.maximumf %21, %22 : vector<8x200xf32>
    %c0_22 = arith.constant 0 : index
    %c0_23 = arith.constant 0 : index
    %24 = vector.load %arg9[%c0_22, %c0_23] : memref<200x14xf32, #tpu.memory_space<vmem>>, vector<200x14xf32>
    %cst_24 = arith.constant dense<0.000000e+00> : vector<8x14xf32>
    %25 = tpu.matmul %23, %24, %cst_24 {dimension_numbers = #tpu.dot_dimension_numbers<[1], [0], [0], [1], [0, 0, 1, 1], [], []>} : vector<8x200xf32>, vector<200x14xf32>, vector<8x14xf32> -> vector<8x14xf32>
    %c0_25 = arith.constant 0 : index
    %c0_26 = arith.constant 0 : index
    %26 = vector.load %arg10[%c0_25, %c0_26] : memref<1x14xf32, #tpu.memory_space<vmem>>, vector<1x14xf32>
    %27 = vector.broadcast %26 : vector<1x14xf32> to vector<8x14xf32>
    %28 = arith.addf %25, %27 : vector<8x14xf32>
    %c0_27 = arith.constant 0 : index
    %c0_28 = arith.constant 0 : index
    %29 = vector.load %arg2[%c0_27, %c0_28] : memref<8x14xf32, #tpu.memory_space<vmem>>, vector<8x14xf32>
    %30 = tpu.concatenate %29, %28 in 0 : vector<8x14xf32>, vector<8x14xf32> -> vector<16x14xf32>
    %c0_29 = arith.constant 0 : index
    %c0_30 = arith.constant 0 : index
    %31 = vector.load %arg12[%c0_29, %c0_30] : memref<14x200xf32, #tpu.memory_space<vmem>>, vector<14x200xf32>
    %cst_31 = arith.constant dense<0.000000e+00> : vector<16x200xf32>
    %32 = tpu.matmul %30, %31, %cst_31 {dimension_numbers = #tpu.dot_dimension_numbers<[1], [0], [0], [1], [0, 0, 1, 1], [], []>} : vector<16x14xf32>, vector<14x200xf32>, vector<16x200xf32> -> vector<16x200xf32>
    %33 = vector.shape_cast %32 : vector<16x200xf32> to vector<2x8x200xf32>
    %34 = vector.shape_cast %10 : vector<8x200xf32> to vector<1x8x200xf32>
    %35 = vector.broadcast %34 : vector<1x8x200xf32> to vector<2x8x200xf32>
    %36 = arith.addf %33, %35 : vector<2x8x200xf32>
    %cst_32 = arith.constant 0.000000e+00 : f32
    %37 = vector.broadcast %cst_32 : f32 to vector<2x8x200xf32>
    %38 = arith.maximumf %36, %37 : vector<2x8x200xf32>
    %39 = vector.shape_cast %38 : vector<2x8x200xf32> to vector<16x200xf32>
    %c0_33 = arith.constant 0 : index
    %c0_34 = arith.constant 0 : index
    %40 = vector.load %arg14[%c0_33, %c0_34] : memref<200x200xf32, #tpu.memory_space<vmem>>, vector<200x200xf32>
    %cst_35 = arith.constant dense<0.000000e+00> : vector<16x200xf32>
    %41 = tpu.matmul %39, %40, %cst_35 {dimension_numbers = #tpu.dot_dimension_numbers<[1], [0], [0], [1], [0, 0, 1, 1], [], []>} : vector<16x200xf32>, vector<200x200xf32>, vector<16x200xf32> -> vector<16x200xf32>
    %c0_36 = arith.constant 0 : index
    %c0_37 = arith.constant 0 : index
    %42 = vector.load %arg15[%c0_36, %c0_37] : memref<1x200xf32, #tpu.memory_space<vmem>>, vector<1x200xf32>
    %43 = vector.broadcast %42 : vector<1x200xf32> to vector<16x200xf32>
    %44 = arith.addf %41, %43 : vector<16x200xf32>
    %cst_38 = arith.constant 0.000000e+00 : f32
    %45 = vector.broadcast %cst_38 : f32 to vector<16x200xf32>
    %46 = arith.maximumf %44, %45 : vector<16x200xf32>
    %c0_39 = arith.constant 0 : index
    %c0_40 = arith.constant 0 : index
    %47 = vector.load %arg16[%c0_39, %c0_40] : memref<200x7xf32, #tpu.memory_space<vmem>>, vector<200x7xf32>
    %cst_41 = arith.constant dense<0.000000e+00> : vector<16x7xf32>
    %48 = tpu.matmul %46, %47, %cst_41 {dimension_numbers = #tpu.dot_dimension_numbers<[1], [0], [0], [1], [0, 0, 1, 1], [], []>} : vector<16x200xf32>, vector<200x7xf32>, vector<16x7xf32> -> vector<16x7xf32>
    %c0_42 = arith.constant 0 : index
    %c0_43 = arith.constant 0 : index
    %49 = vector.load %arg17[%c0_42, %c0_43] : memref<1x7xf32, #tpu.memory_space<vmem>>, vector<1x7xf32>
    %50 = vector.broadcast %49 : vector<1x7xf32> to vector<16x7xf32>
    %51 = arith.addf %48, %50 : vector<16x7xf32>
    %52 = vector.extract_strided_slice %51 {offsets = [0, 0], sizes = [8, 7], strides = [1, 1]} : vector<16x7xf32> to vector<8x7xf32>
    %53 = vector.extract_strided_slice %51 {offsets = [8, 0], sizes = [8, 7], strides = [1, 1]} : vector<16x7xf32> to vector<8x7xf32>
    %c0_44 = arith.constant 0 : index
    %c0_45 = arith.constant 0 : index
    %54 = vector.load %arg5[%c0_44, %c0_45] : memref<7x200xf32, #tpu.memory_space<vmem>>, vector<7x200xf32>
    %cst_46 = arith.constant dense<0.000000e+00> : vector<8x200xf32>
    %55 = tpu.matmul %52, %54, %cst_46 {dimension_numbers = #tpu.dot_dimension_numbers<[1], [0], [0], [1], [0, 0, 1, 1], [], []>} : vector<8x7xf32>, vector<7x200xf32>, vector<8x200xf32> -> vector<8x200xf32>
    %56 = arith.addf %5, %55 : vector<8x200xf32>
    %cst_47 = arith.constant 0.000000e+00 : f32
    %57 = vector.broadcast %cst_47 : f32 to vector<8x200xf32>
    %58 = arith.maximumf %56, %57 : vector<8x200xf32>
    %c0_48 = arith.constant 0 : index
    %c0_49 = arith.constant 0 : index
    %59 = vector.load %arg7[%c0_48, %c0_49] : memref<200x200xf32, #tpu.memory_space<vmem>>, vector<200x200xf32>
    %cst_50 = arith.constant dense<0.000000e+00> : vector<8x200xf32>
    %60 = tpu.matmul %58, %59, %cst_50 {dimension_numbers = #tpu.dot_dimension_numbers<[1], [0], [0], [1], [0, 0, 1, 1], [], []>} : vector<8x200xf32>, vector<200x200xf32>, vector<8x200xf32> -> vector<8x200xf32>
    %c0_51 = arith.constant 0 : index
    %c0_52 = arith.constant 0 : index
    %61 = vector.load %arg8[%c0_51, %c0_52] : memref<1x200xf32, #tpu.memory_space<vmem>>, vector<1x200xf32>
    %62 = vector.broadcast %61 : vector<1x200xf32> to vector<8x200xf32>
    %63 = arith.addf %60, %62 : vector<8x200xf32>
    %cst_53 = arith.constant 0.000000e+00 : f32
    %64 = vector.broadcast %cst_53 : f32 to vector<8x200xf32>
    %65 = arith.maximumf %63, %64 : vector<8x200xf32>
    %c0_54 = arith.constant 0 : index
    %c0_55 = arith.constant 0 : index
    %66 = vector.load %arg9[%c0_54, %c0_55] : memref<200x14xf32, #tpu.memory_space<vmem>>, vector<200x14xf32>
    %cst_56 = arith.constant dense<0.000000e+00> : vector<8x14xf32>
    %67 = tpu.matmul %65, %66, %cst_56 {dimension_numbers = #tpu.dot_dimension_numbers<[1], [0], [0], [1], [0, 0, 1, 1], [], []>} : vector<8x200xf32>, vector<200x14xf32>, vector<8x14xf32> -> vector<8x14xf32>
    %c0_57 = arith.constant 0 : index
    %c0_58 = arith.constant 0 : index
    %68 = vector.load %arg10[%c0_57, %c0_58] : memref<1x14xf32, #tpu.memory_space<vmem>>, vector<1x14xf32>
    %69 = vector.broadcast %68 : vector<1x14xf32> to vector<8x14xf32>
    %70 = arith.addf %67, %69 : vector<8x14xf32>
    %71 = tpu.concatenate %28, %52, %53, %70 in 1 : vector<8x14xf32>, vector<8x7xf32>, vector<8x7xf32>, vector<8x14xf32> -> vector<8x42xf32>
    %cst_59 = arith.constant 0.000000e+00 : f32
    %72 = vector.broadcast %cst_59 : f32 to vector<8x86xf32>
    %73 = tpu.concatenate %71, %72 in 1 : vector<8x42xf32>, vector<8x86xf32> -> vector<8x128xf32>
    %c0_60 = arith.constant 0 : index
    %c0_61 = arith.constant 0 : index
    %74 = vector.load %arg18[%c0_60, %c0_61] : memref<8x128xf32, #tpu.memory_space<vmem>>, vector<8x128xf32>
    tpu.vector_store %arg18[%c0_60, %c0_61], %73 {strides = array<i32>} : memref<8x128xf32, #tpu.memory_space<vmem>>, vector<8x128xf32>,
    return
  }
  func.func @transform_0(%arg0: i32) -> (i32, i32) {
    %c0_i32 = arith.constant 0 : i32
    %c0_i32_0 = arith.constant 0 : i32
    return %arg0, %c0_i32 : i32, i32
  }
  func.func @transform_1(%arg0: i32) -> (i32, i32) {
    %c0_i32 = arith.constant 0 : i32
    %c0_i32_0 = arith.constant 0 : i32
    return %arg0, %c0_i32 : i32, i32
  }
  func.func @transform_2(%arg0: i32) -> (i32, i32) {
    %c0_i32 = arith.constant 0 : i32
    %c0_i32_0 = arith.constant 0 : i32
    return %arg0, %c0_i32 : i32, i32
  }
  func.func @transform_3(%arg0: i32) -> (i32, i32) {
    %c0_i32 = arith.constant 0 : i32
    %c0_i32_0 = arith.constant 0 : i32
    %c0_i32_1 = arith.constant 0 : i32
    return %c0_i32, %c0_i32_0 : i32, i32
  }
  func.func @transform_4(%arg0: i32) -> (i32, i32) {
    %c0_i32 = arith.constant 0 : i32
    %c0_i32_0 = arith.constant 0 : i32
    %c0_i32_1 = arith.constant 0 : i32
    return %c0_i32, %c0_i32_0 : i32, i32
  }
  func.func @transform_5(%arg0: i32) -> (i32, i32) {
    %c0_i32 = arith.constant 0 : i32
    %c0_i32_0 = arith.constant 0 : i32
    %c0_i32_1 = arith.constant 0 : i32
    return %c0_i32, %c0_i32_0 : i32, i32
  }
  func.func @transform_6(%arg0: i32) -> (i32, i32) {
    %c0_i32 = arith.constant 0 : i32
    %c0_i32_0 = arith.constant 0 : i32
    %c0_i32_1 = arith.constant 0 : i32
    return %c0_i32, %c0_i32_0 : i32, i32
  }
  func.func @transform_7(%arg0: i32) -> (i32, i32) {
    %c0_i32 = arith.constant 0 : i32
    %c0_i32_0 = arith.constant 0 : i32
    %c0_i32_1 = arith.constant 0 : i32
    return %c0_i32, %c0_i32_0 : i32, i32
  }
  func.func @transform_8(%arg0: i32) -> (i32, i32) {
    %c0_i32 = arith.constant 0 : i32
    %c0_i32_0 = arith.constant 0 : i32
    %c0_i32_1 = arith.constant 0 : i32
    return %c0_i32, %c0_i32_0 : i32, i32
  }
  func.func @transform_9(%arg0: i32) -> (i32, i32) {
    %c0_i32 = arith.constant 0 : i32
    %c0_i32_0 = arith.constant 0 : i32
    %c0_i32_1 = arith.constant 0 : i32
    return %c0_i32, %c0_i32_0 : i32, i32
  }
  func.func @transform_10(%arg0: i32) -> (i32, i32) {
    %c0_i32 = arith.constant 0 : i32
    %c0_i32_0 = arith.constant 0 : i32
    %c0_i32_1 = arith.constant 0 : i32
    return %c0_i32, %c0_i32_0 : i32, i32
  }
  func.func @transform_11(%arg0: i32) -> (i32, i32) {
    %c0_i32 = arith.constant 0 : i32
    %c0_i32_0 = arith.constant 0 : i32
    %c0_i32_1 = arith.constant 0 : i32
    return %c0_i32, %c0_i32_0 : i32, i32
  }
  func.func @transform_12(%arg0: i32) -> (i32, i32) {
    %c0_i32 = arith.constant 0 : i32
    %c0_i32_0 = arith.constant 0 : i32
    %c0_i32_1 = arith.constant 0 : i32
    return %c0_i32, %c0_i32_0 : i32, i32
  }
  func.func @transform_13(%arg0: i32) -> (i32, i32) {
    %c0_i32 = arith.constant 0 : i32
    %c0_i32_0 = arith.constant 0 : i32
    %c0_i32_1 = arith.constant 0 : i32
    return %c0_i32, %c0_i32_0 : i32, i32
  }
  func.func @transform_14(%arg0: i32) -> (i32, i32) {
    %c0_i32 = arith.constant 0 : i32
    %c0_i32_0 = arith.constant 0 : i32
    %c0_i32_1 = arith.constant 0 : i32
    return %c0_i32, %c0_i32_0 : i32, i32
  }
  func.func @transform_15(%arg0: i32) -> (i32, i32) {
    %c0_i32 = arith.constant 0 : i32
    %c0_i32_0 = arith.constant 0 : i32
    %c0_i32_1 = arith.constant 0 : i32
    return %c0_i32, %c0_i32_0 : i32, i32
  }
  func.func @transform_16(%arg0: i32) -> (i32, i32) {
    %c0_i32 = arith.constant 0 : i32
    %c0_i32_0 = arith.constant 0 : i32
    %c0_i32_1 = arith.constant 0 : i32
    return %c0_i32, %c0_i32_0 : i32, i32
  }
  func.func @transform_17(%arg0: i32) -> (i32, i32) {
    %c0_i32 = arith.constant 0 : i32
    %c0_i32_0 = arith.constant 0 : i32
    return %arg0, %c0_i32 : i32, i32
  }
}

</mosaic_0001>

<llo_original>
// kernel: tpu_custom_call.1
$region0: #{tpu_custom_call.1}
  #allocation0 [shape = 'u32[]', space=smem, size = 0x4, offset = 0x4, fixed_abs, tag = 'smem constant byte address 0x4 - core index']
  #allocation1 [shape = 'u32[144,128]{1,0:T(1,128)}', space=vmem, size = 0x12000, scoped, tag = 'internal scratch']
  %s0 = inlined_call_operand.vmem [shape: f32[8,56], index: 0, kind: input, shape index: {}]
  %s1 = inlined_call_operand.hbm [shape: f32[8,14], index: 1, kind: input, shape index: {}]
  %s2 = inlined_call_operand.hbm [shape: f32[8,7], index: 2, kind: input, shape index: {}]
  %s3 = inlined_call_operand.hbm [shape: f32[56,200], index: 3, kind: input, shape index: {}]
  %s4 = inlined_call_operand.hbm [shape: f32[7,200], index: 4, kind: input, shape index: {}]
  %s5 = inlined_call_operand.vmem [shape: f32[1,200], index: 5, kind: input, shape index: {}]
  %s6 = inlined_call_operand.vmem [shape: f32[200,200], index: 6, kind: input, shape index: {}]
  %s7 = inlined_call_operand.vmem [shape: f32[1,200], index: 7, kind: input, shape index: {}]
  %s8 = inlined_call_operand.vmem [shape: f32[200,14], index: 8, kind: input, shape index: {}]
  %s9 = inlined_call_operand.hbm [shape: f32[1,14], index: 9, kind: input, shape index: {}]
  %s10 = inlined_call_operand.hbm [shape: f32[56,200], index: 10, kind: input, shape index: {}]
  %s11 = inlined_call_operand.vmem [shape: f32[14,200], index: 11, kind: input, shape index: {}]
  %s12 = inlined_call_operand.vmem [shape: f32[1,200], index: 12, kind: input, shape index: {}]
  %s13 = inlined_call_operand.hbm [shape: f32[200,200], index: 13, kind: input, shape index: {}]
  %s14 = inlined_call_operand.vmem [shape: f32[1,200], index: 14, kind: input, shape index: {}]
  %s15 = inlined_call_operand.vmem [shape: f32[200,7], index: 15, kind: input, shape index: {}]
  %s16 = inlined_call_operand.vmem [shape: f32[1,7], index: 16, kind: input, shape index: {}]
  %s17 = inlined_call_operand.hbm [shape: f32[8,128], index: 17, kind: output, shape index: {}]
  %s18 = sld [smem:[#allocation0]]
  $region106: #{tpu_custom_call.1} parent=0
    _
  %s20 = ssub.s32 1, %s18
  %s21 = scalar_select 0, %s20, %s18
  $region1: #{tpu_custom_call.1} parent=0
    #allocation2 [shape = 'u8[4096]{0}', space=vmem, size = 0x1000, scoped, tag = 'input window, operand 1, single buffered']
    #allocation3 [shape = 's32[1]{0}', space=sflag, size = 0x4, scoped, tag = 'scoped memory for tpu_custom_call.1']
    #allocation4 [shape = 's32[1]{0}', space=sflag, size = 0x4, scoped, tag = 'scoped memory for tpu_custom_call.1']
    #allocation5 [shape = 'u8[4096]{0}', space=vmem, size = 0x1000, scoped, tag = 'input window, operand 2, single buffered']
    #allocation6 [shape = 's32[1]{0}', space=sflag, size = 0x4, scoped, tag = 'scoped memory for tpu_custom_call.1']
    #allocation7 [shape = 'u8[57344]{0}', space=vmem, size = 0xe000, scoped, tag = 'input window, operand 3, single buffered']
    #allocation8 [shape = 'u8[8192]{0}', space=vmem, size = 0x2000, scoped, tag = 'input window, operand 4, single buffered']
    #allocation9 [shape = 's32[1]{0}', space=sflag, size = 0x4, scoped, tag = 'scoped memory for tpu_custom_call.1']
    #allocation10 [shape = 'u8[512]{0}', space=vmem, size = 0x400, scoped, tag = 'input window, operand 9, single buffered']
    #allocation11 [shape = 'u8[57344]{0}', space=vmem, size = 0xe000, scoped, tag = 'input window, operand 10, single buffered']
    #allocation12 [shape = 's32[1]{0}', space=sflag, size = 0x4, scoped, tag = 'scoped memory for tpu_custom_call.1']
    #allocation13 [shape = 'u8[204800]{0}', space=vmem, size = 0x32000, scoped, tag = 'input window, operand 13, single buffered']
    #allocation14 [shape = 'u8[4096]{0}', space=vmem, size = 0x1000, scoped, tag = 'output window, operand 0, single buffered']
    %22 = vsyncpa [#allocation3], 0
    %23 = vsyncpa [#allocation6], 0
    %24 = vsyncpa [#allocation9], 0
    %25 = vsyncpa [#allocation12], 0
    %26 = vsyncpa [#allocation4], 0
    // Predicated region
    $region2: #{tpu_custom_call.1} parent=1 // pred_check
      _
    $region3: #{tpu_custom_call.1} parent=1 // pred_check_branch
      %28 = sbr.rel (0) target = $region5
    $region4: #{tpu_custom_call.1} parent=1 // pred_region
      _
    $region5: #{tpu_custom_call.1} parent=1 // pred_fallthru
      _
    // Predicated region
    $region6: #{tpu_custom_call.1} parent=1 // pred_check
      _
    $region7: #{tpu_custom_call.1} parent=1 // pred_check_branch
      %30 = sbr.rel (0) target = $region9
    $region8: #{tpu_custom_call.1} parent=1 // pred_region
      %s32 = ssub.s32 128, 128
      %33 = vsyncadd [#allocation3], %s32
      %s35 = sshll.u32 [#allocation2], 4
      %s36 = int_to_ptr.vmem [resolvable:$true] %s35
      %38 = dma.hbm_to_vmem [thread:$0]  %s1, 128, %s36, [#allocation3]
    $region9: #{tpu_custom_call.1} parent=1 // pred_fallthru
      _
    // Predicated region
    $region10: #{tpu_custom_call.1} parent=1 // pred_check
      _
    $region11: #{tpu_custom_call.1} parent=1 // pred_check_branch
      %40 = sbr.rel (0) target = $region13
    $region12: #{tpu_custom_call.1} parent=1 // pred_region
      %s42 = ssub.s32 128, 128
      %43 = vsyncadd [#allocation6], %s42
      %s45 = sshll.u32 [#allocation5], 4
      %s46 = int_to_ptr.vmem [resolvable:$true] %s45
      %48 = dma.hbm_to_vmem [thread:$0]  %s2, 128, %s46, [#allocation6]
    $region13: #{tpu_custom_call.1} parent=1 // pred_fallthru
      _
    // Predicated region
    $region14: #{tpu_custom_call.1} parent=1 // pred_check
      _
    $region15: #{tpu_custom_call.1} parent=1 // pred_check_branch
      %50 = sbr.rel (0) target = $region17
    $region16: #{tpu_custom_call.1} parent=1 // pred_region
      %s52 = ssub.s32 1792, 1792
      %53 = vsyncadd [#allocation6], %s52
      %s54 = sshll.u32 [#allocation7], 4
      %s55 = int_to_ptr.vmem [resolvable:$true] %s54
      %60 = dma.hbm_to_vmem [thread:$0]  %s3, 1792, %s55, [#allocation6], 256, 256, 16
    $region17: #{tpu_custom_call.1} parent=1 // pred_fallthru
      _
    // Predicated region
    $region18: #{tpu_custom_call.1} parent=1 // pred_check
      _
    $region19: #{tpu_custom_call.1} parent=1 // pred_check_branch
      %62 = sbr.rel (0) target = $region21
    $region20: #{tpu_custom_call.1} parent=1 // pred_region
      %s64 = ssub.s32 256, 256
      %65 = vsyncadd [#allocation9], %s64
      %s67 = sshll.u32 [#allocation8], 4
      %s68 = int_to_ptr.vmem [resolvable:$true] %s67
      %70 = dma.hbm_to_vmem [thread:$0]  %s4, 256, %s68, [#allocation9]
    $region21: #{tpu_custom_call.1} parent=1 // pred_fallthru
      _
    // Predicated region
    $region22: #{tpu_custom_call.1} parent=1 // pred_check
      _
    $region23: #{tpu_custom_call.1} parent=1 // pred_check_branch
      %72 = sbr.rel (0) target = $region25
    $region24: #{tpu_custom_call.1} parent=1 // pred_region
      _
    $region25: #{tpu_custom_call.1} parent=1 // pred_fallthru
      _
    // Predicated region
    $region26: #{tpu_custom_call.1} parent=1 // pred_check
      _
    $region27: #{tpu_custom_call.1} parent=1 // pred_check_branch
      %74 = sbr.rel (0) target = $region29
    $region28: #{tpu_custom_call.1} parent=1 // pred_region
      _
    $region29: #{tpu_custom_call.1} parent=1 // pred_fallthru
      _
    // Predicated region
    $region30: #{tpu_custom_call.1} parent=1 // pred_check
      _
    $region31: #{tpu_custom_call.1} parent=1 // pred_check_branch
      %76 = sbr.rel (0) target = $region33
    $region32: #{tpu_custom_call.1} parent=1 // pred_region
      _
    $region33: #{tpu_custom_call.1} parent=1 // pred_fallthru
      _
    // Predicated region
    $region34: #{tpu_custom_call.1} parent=1 // pred_check
      _
    $region35: #{tpu_custom_call.1} parent=1 // pred_check_branch
      %78 = sbr.rel (0) target = $region37
    $region36: #{tpu_custom_call.1} parent=1 // pred_region
      _
    $region37: #{tpu_custom_call.1} parent=1 // pred_fallthru
      _
    // Predicated region
    $region38: #{tpu_custom_call.1} parent=1 // pred_check
      _
    $region39: #{tpu_custom_call.1} parent=1 // pred_check_branch
      %80 = sbr.rel (0) target = $region41
    $region40: #{tpu_custom_call.1} parent=1 // pred_region
      %s82 = ssub.s32 16, 16
      %83 = vsyncadd [#allocation9], %s82
      %s85 = sshll.u32 [#allocation10], 4
      %s86 = int_to_ptr.vmem [resolvable:$true] %s85
      %88 = dma.hbm_to_vmem [thread:$0]  %s9, 16, %s86, [#allocation9]
    $region41: #{tpu_custom_call.1} parent=1 // pred_fallthru
      _
    // Predicated region
    $region42: #{tpu_custom_call.1} parent=1 // pred_check
      _
    $region43: #{tpu_custom_call.1} parent=1 // pred_check_branch
      %90 = sbr.rel (0) target = $region45
    $region44: #{tpu_custom_call.1} parent=1 // pred_region
      %s92 = ssub.s32 1792, 1792
      %93 = vsyncadd [#allocation12], %s92
      %s94 = sshll.u32 [#allocation11], 4
      %s95 = int_to_ptr.vmem [resolvable:$true] %s94
      %100 = dma.hbm_to_vmem [thread:$0]  %s10, 1792, %s95, [#allocation12], 256, 256, 16
    $region45: #{tpu_custom_call.1} parent=1 // pred_fallthru
      _
    // Predicated region
    $region46: #{tpu_custom_call.1} parent=1 // pred_check
      _
    $region47: #{tpu_custom_call.1} parent=1 // pred_check_branch
      %102 = sbr.rel (0) target = $region49
    $region48: #{tpu_custom_call.1} parent=1 // pred_region
      _
    $region49: #{tpu_custom_call.1} parent=1 // pred_fallthru
      _
    // Predicated region
    $region50: #{tpu_custom_call.1} parent=1 // pred_check
      _
    $region51: #{tpu_custom_call.1} parent=1 // pred_check_branch
      %104 = sbr.rel (0) target = $region53
    $region52: #{tpu_custom_call.1} parent=1 // pred_region
      _
    $region53: #{tpu_custom_call.1} parent=1 // pred_fallthru
      _
    // Predicated region
    $region54: #{tpu_custom_call.1} parent=1 // pred_check
      _
    $region55: #{tpu_custom_call.1} parent=1 // pred_check_branch
      %106 = sbr.rel (0) target = $region57
    $region56: #{tpu_custom_call.1} parent=1 // pred_region
      %s108 = ssub.s32 6400, 6400
      %109 = vsyncadd [#allocation12], %s108
      %s110 = sshll.u32 [#allocation13], 4
      %s111 = int_to_ptr.vmem [resolvable:$true] %s110
      %116 = dma.hbm_to_vmem [thread:$0]  %s13, 6400, %s111, [#allocation12], 256, 256, 16
    $region57: #{tpu_custom_call.1} parent=1 // pred_fallthru
      _
    // Predicated region
    $region58: #{tpu_custom_call.1} parent=1 // pred_check
      _
    $region59: #{tpu_custom_call.1} parent=1 // pred_check_branch
      %118 = sbr.rel (0) target = $region61
    $region60: #{tpu_custom_call.1} parent=1 // pred_region
      _
    $region61: #{tpu_custom_call.1} parent=1 // pred_fallthru
      _
    // Predicated region
    $region62: #{tpu_custom_call.1} parent=1 // pred_check
      _
    $region63: #{tpu_custom_call.1} parent=1 // pred_check_branch
      %120 = sbr.rel (0) target = $region65
    $region64: #{tpu_custom_call.1} parent=1 // pred_region
      _
    $region65: #{tpu_custom_call.1} parent=1 // pred_fallthru
      _
    // Predicated region
    $region66: #{tpu_custom_call.1} parent=1 // pred_check
      _
    $region67: #{tpu_custom_call.1} parent=1 // pred_check_branch
      %122 = sbr.rel (0) target = $region69
    $region68: #{tpu_custom_call.1} parent=1 // pred_region
      _
    $region69: #{tpu_custom_call.1} parent=1 // pred_fallthru
      _
    // Predicated region
    $region70: #{tpu_custom_call.1} parent=1 // pred_check
      _
    $region71: #{tpu_custom_call.1} parent=1 // pred_check_branch
      %124 = sbr.rel (0) target = $region73
    $region72: #{tpu_custom_call.1} parent=1 // pred_region
      %125 = dma.done [#allocation3], 128
    $region73: #{tpu_custom_call.1} parent=1 // pred_fallthru
      _
    // Predicated region
    $region74: #{tpu_custom_call.1} parent=1 // pred_check
      _
    $region75: #{tpu_custom_call.1} parent=1 // pred_check_branch
      %127 = sbr.rel (0) target = $region77
    $region76: #{tpu_custom_call.1} parent=1 // pred_region
      %128 = dma.done [#allocation6], 128
    $region77: #{tpu_custom_call.1} parent=1 // pred_fallthru
      _
    // Predicated region
    $region78: #{tpu_custom_call.1} parent=1 // pred_check
      _
    $region79: #{tpu_custom_call.1} parent=1 // pred_check_branch
      %130 = sbr.rel (0) target = $region81
    $region80: #{tpu_custom_call.1} parent=1 // pred_region
      %131 = dma.done [#allocation6], 1792
    $region81: #{tpu_custom_call.1} parent=1 // pred_fallthru
      _
    // Predicated region
    $region82: #{tpu_custom_call.1} parent=1 // pred_check
      _
    $region83: #{tpu_custom_call.1} parent=1 // pred_check_branch
      %133 = sbr.rel (0) target = $region85
    $region84: #{tpu_custom_call.1} parent=1 // pred_region
      %134 = dma.done [#allocation9], 256
    $region85: #{tpu_custom_call.1} parent=1 // pred_fallthru
      _
    // Predicated region
    $region86: #{tpu_custom_call.1} parent=1 // pred_check
      _
    $region87: #{tpu_custom_call.1} parent=1 // pred_check_branch
      %136 = sbr.rel (0) target = $region89
    $region88: #{tpu_custom_call.1} parent=1 // pred_region
      %137 = dma.done [#allocation9], 16
    $region89: #{tpu_custom_call.1} parent=1 // pred_fallthru
      _
    // Predicated region
    $region90: #{tpu_custom_call.1} parent=1 // pred_check
      _
    $region91: #{tpu_custom_call.1} parent=1 // pred_check_branch
      %139 = sbr.rel (0) target = $region93
    $region92: #{tpu_custom_call.1} parent=1 // pred_region
      %140 = dma.done [#allocation12], 1792
    $region93: #{tpu_custom_call.1} parent=1 // pred_fallthru
      _
    // Predicated region
    $region94: #{tpu_custom_call.1} parent=1 // pred_check
      _
    $region95: #{tpu_custom_call.1} parent=1 // pred_check_branch
      %142 = sbr.rel (0) target = $region97
    $region96: #{tpu_custom_call.1} parent=1 // pred_region
      %143 = dma.done [#allocation12], 6400
    $region97: #{tpu_custom_call.1} parent=1 // pred_fallthru
      _
    %v144 = vld [vmem:[%s0] sm:$0xff]
    %v145 = vld [vmem:[#allocation7] sm:$0xff]
    %v146 = vld [vmem:[#allocation7 + $0x8] sm:$0xff]
    %v147 = vld [vmem:[#allocation7 + $0x10] sm:$0xff]
    %v148 = vld [vmem:[#allocation7 + $0x18] sm:$0xff]
    %v149 = vld [vmem:[#allocation7 + $0x20] sm:$0xff]
    %v150 = vld [vmem:[#allocation7 + $0x28] sm:$0xff]
    %v151 = vld [vmem:[#allocation7 + $0x30] sm:$0xff]
    %v152 = vld [vmem:[#allocation7 + $0x38] sm:$0xff]
    %v153 = vld [vmem:[#allocation7 + $0x40] sm:$0xff]
    %v154 = vld [vmem:[#allocation7 + $0x48] sm:$0xff]
    %v155 = vld [vmem:[#allocation7 + $0x50] sm:$0xff]
    %v156 = vld [vmem:[#allocation7 + $0x58] sm:$0xff]
    %v157 = vld [vmem:[#allocation7 + $0x60] sm:$0xff]
    %v158 = vld [vmem:[#allocation7 + $0x68] sm:$0xff]
    %v159 = vld [vmem:[%s5] sm:$0x3]
    %v161 = vlaneseq
    %v162 = vshrl.u32 %v161, 7
    %v163 = vsub.s32 0, %v162
    %v164 = vrot.slane %v159, %v163
    %v165 = vlaneseq
    %v166 = vshrl.u32 %v165, 7
    %v167 = vsub.s32 1, %v166
    %v168 = vrot.slane %v159, %v167
    %vm171 = vcmask 457728
    %v173 = vsel %vm171, %v144, 0
    %175 = vmatprep.subr.mxu0 0.0
    %176 = vmatpush1.msra.mxu0 0.0
    %177 = vmatprep.subr.mxu0 0.0
    %178 = vmatpush1.msra.mxu0 0.0
    %179 = vmatprep.subr.mxu0 0.0
    %180 = vmatpush1.msra.mxu0 0.0
    %181 = vmatprep.subr.mxu0 0.0
    %182 = vmatpush1.msra.mxu0 0.0
    %183 = vmatprep.subr.mxu0 0.0
    %184 = vmatpush1.msra.mxu0 0.0
    %185 = vmatprep.subr.mxu0 0.0
    %186 = vmatpush1.msra.mxu0 0.0
    %187 = vmatprep.subr.mxu0 0.0
    %188 = vmatpush1.msra.mxu0 0.0
    %189 = vmatprep.subr.mxu0 0.0
    %190 = vmatpush1.msra.mxu0 0.0
    %191 = vmatprep.subr.mxu0 0.0
    %192 = vmatpush1.msra.mxu0 0.0
    %193 = vmatprep.subr.mxu0 %v158
    %194 = vmatpush1.msra.mxu0 %v157
    %195 = vmatprep.subr.mxu0 %v156
    %196 = vmatpush1.msra.mxu0 %v155
    %197 = vmatprep.subr.mxu0 %v154
    %198 = vmatpush1.msra.mxu0 %v153
    %199 = vmatprep.subr.mxu0 %v152
    %200 = vmatpush1.msra.mxu0 %v151
    %201 = vmatprep.subr.mxu0 %v150
    %202 = vmatpush1.msra.mxu0 %v149
    %203 = vmatprep.subr.mxu0 %v148
    %204 = vmatpush1.msra.mxu0 %v147
    %205 = vmatprep.subr.mxu0 %v146
    %206 = vmatpush1.msra.mxu0 %v145
    %207 = vmatprep.subr.mxu0 0.0
    %208 = vmatpush2.msra.mxu0 0.0
    %209 = vmatprep.subr.mxu0 0.0
    %210 = vmatpush2.msra.mxu0 0.0
    %211 = vmatprep.subr.mxu0 0.0
    %212 = vmatpush2.msra.mxu0 0.0
    %213 = vmatprep.subr.mxu0 0.0
    %214 = vmatpush2.msra.mxu0 0.0
    %215 = vmatprep.subr.mxu0 0.0
    %216 = vmatpush2.msra.mxu0 0.0
    %217 = vmatprep.subr.mxu0 0.0
    %218 = vmatpush2.msra.mxu0 0.0
    %219 = vmatprep.subr.mxu0 0.0
    %220 = vmatpush2.msra.mxu0 0.0
    %221 = vmatprep.subr.mxu0 0.0
    %222 = vmatpush2.msra.mxu0 0.0
    %223 = vmatprep.subr.mxu0 0.0
    %224 = vmatpush2.msra.mxu0 0.0
    %225 = vmatprep.subr.mxu0 0.0
    %226 = vmatpush2.msra.mxu0 0.0
    %227 = vmatprep.subr.mxu0 0.0
    %228 = vmatpush2.msra.mxu0 0.0
    %229 = vmatprep.subr.mxu0 0.0
    %230 = vmatpush2.msra.mxu0 0.0
    %231 = vmatprep.subr.mxu0 0.0
    %232 = vmatpush2.msra.mxu0 0.0
    %233 = vmatprep.subr.mxu0 0.0
    %234 = vmatpush2.msra.mxu0 0.0
    %235 = vmatprep.subr.mxu0 0.0
    %236 = vmatpush2.msra.mxu0 0.0
    %237 = vmatprep.subr.mxu0 0.0
    %238 = vmatpush2.msra.mxu0 0.0
    %239 = vmatprep.mubr.f32.mxu0 0.0
    %240 = vmatmul.mubr.f32.gmra.mxu0 %v173
    %v241 = vpop.f32.mrf.mxu0
    %v242 = vadd.f32 %v164, %v241
    %v243 = vpop.f32.mrf.mxu0
    %v244 = vadd.f32 %v168, %v243
    %245 = vdwg.mxu0
    %v246 = vld [vmem:[#allocation11] sm:$0xff]
    %v247 = vld [vmem:[#allocation11 + $0x8] sm:$0xff]
    %v248 = vld [vmem:[#allocation11 + $0x10] sm:$0xff]
    %v249 = vld [vmem:[#allocation11 + $0x18] sm:$0xff]
    %v250 = vld [vmem:[#allocation11 + $0x20] sm:$0xff]
    %v251 = vld [vmem:[#allocation11 + $0x28] sm:$0xff]
    %v252 = vld [vmem:[#allocation11 + $0x30] sm:$0xff]
    %v253 = vld [vmem:[#allocation11 + $0x38] sm:$0xff]
    %v254 = vld [vmem:[#allocation11 + $0x40] sm:$0xff]
    %v255 = vld [vmem:[#allocation11 + $0x48] sm:$0xff]
    %v256 = vld [vmem:[#allocation11 + $0x50] sm:$0xff]
    %v257 = vld [vmem:[#allocation11 + $0x58] sm:$0xff]
    %v258 = vld [vmem:[#allocation11 + $0x60] sm:$0xff]
    %v259 = vld [vmem:[#allocation11 + $0x68] sm:$0xff]
    %v260 = vld [vmem:[%s12] sm:$0x3]
    %v262 = vlaneseq
    %v263 = vshrl.u32 %v262, 7
    %v264 = vsub.s32 0, %v263
    %v265 = vrot.slane %v260, %v264
    %v266 = vlaneseq
    %v267 = vshrl.u32 %v266, 7
    %v268 = vsub.s32 1, %v267
    %v269 = vrot.slane %v260, %v268
    %272 = vmatprep.subr.mxu0 0.0
    %273 = vmatpush1.msra.mxu0 0.0
    %274 = vmatprep.subr.mxu0 0.0
    %275 = vmatpush1.msra.mxu0 0.0
    %276 = vmatprep.subr.mxu0 0.0
    %277 = vmatpush1.msra.mxu0 0.0
    %278 = vmatprep.subr.mxu0 0.0
    %279 = vmatpush1.msra.mxu0 0.0
    %280 = vmatprep.subr.mxu0 0.0
    %281 = vmatpush1.msra.mxu0 0.0
    %282 = vmatprep.subr.mxu0 0.0
    %283 = vmatpush1.msra.mxu0 0.0
    %284 = vmatprep.subr.mxu0 0.0
    %285 = vmatpush1.msra.mxu0 0.0
    %286 = vmatprep.subr.mxu0 0.0
    %287 = vmatpush1.msra.mxu0 0.0
    %288 = vmatprep.subr.mxu0 0.0
    %289 = vmatpush1.msra.mxu0 0.0
    %290 = vmatprep.subr.mxu0 %v259
    %291 = vmatpush1.msra.mxu0 %v258
    %292 = vmatprep.subr.mxu0 %v257
    %293 = vmatpush1.msra.mxu0 %v256
    %294 = vmatprep.subr.mxu0 %v255
    %295 = vmatpush1.msra.mxu0 %v254
    %296 = vmatprep.subr.mxu0 %v253
    %297 = vmatpush1.msra.mxu0 %v252
    %298 = vmatprep.subr.mxu0 %v251
    %299 = vmatpush1.msra.mxu0 %v250
    %300 = vmatprep.subr.mxu0 %v249
    %301 = vmatpush1.msra.mxu0 %v248
    %302 = vmatprep.subr.mxu0 %v247
    %303 = vmatpush1.msra.mxu0 %v246
    %304 = vmatprep.subr.mxu0 0.0
    %305 = vmatpush2.msra.mxu0 0.0
    %306 = vmatprep.subr.mxu0 0.0
    %307 = vmatpush2.msra.mxu0 0.0
    %308 = vmatprep.subr.mxu0 0.0
    %309 = vmatpush2.msra.mxu0 0.0
    %310 = vmatprep.subr.mxu0 0.0
    %311 = vmatpush2.msra.mxu0 0.0
    %312 = vmatprep.subr.mxu0 0.0
    %313 = vmatpush2.msra.mxu0 0.0
    %314 = vmatprep.subr.mxu0 0.0
    %315 = vmatpush2.msra.mxu0 0.0
    %316 = vmatprep.subr.mxu0 0.0
    %317 = vmatpush2.msra.mxu0 0.0
    %318 = vmatprep.subr.mxu0 0.0
    %319 = vmatpush2.msra.mxu0 0.0
    %320 = vmatprep.subr.mxu0 0.0
    %321 = vmatpush2.msra.mxu0 0.0
    %322 = vmatprep.subr.mxu0 0.0
    %323 = vmatpush2.msra.mxu0 0.0
    %324 = vmatprep.subr.mxu0 0.0
    %325 = vmatpush2.msra.mxu0 0.0
    %326 = vmatprep.subr.mxu0 0.0
    %327 = vmatpush2.msra.mxu0 0.0
    %328 = vmatprep.subr.mxu0 0.0
    %329 = vmatpush2.msra.mxu0 0.0
    %330 = vmatprep.subr.mxu0 0.0
    %331 = vmatpush2.msra.mxu0 0.0
    %332 = vmatprep.subr.mxu0 0.0
    %333 = vmatpush2.msra.mxu0 0.0
    %334 = vmatprep.subr.mxu0 0.0
    %335 = vmatpush2.msra.mxu0 0.0
    %336 = vmatprep.mubr.f32.mxu0 0.0
    %337 = vmatmul.mubr.f32.gmra.mxu0 %v173
    %v338 = vpop.f32.mrf.mxu0
    %v339 = vadd.f32 %v265, %v338
    %v340 = vpop.f32.mrf.mxu0
    %v341 = vadd.f32 %v269, %v340
    %342 = vdwg.mxu0
    %v343 = vld [vmem:[#allocation5] sm:$0xff]
    %v344 = vld [vmem:[#allocation8] sm:$0x7f]
    %v345 = vld [vmem:[#allocation8 + $0x8] sm:$0x7f]
    %vm346 = vcmask 56320
    %v348 = vsel %vm346, %v343, 0
    %vm350 = vcmask 1046528
    %v352 = vsel %vm350, %v344, 0
    %v355 = vsel %vm350, %v345, 0
    %357 = vmatprep.subr.mxu0 0.0
    %358 = vmatpush1.msra.mxu0 0.0
    %359 = vmatprep.subr.mxu0 0.0
    %360 = vmatpush1.msra.mxu0 0.0
    %361 = vmatprep.subr.mxu0 0.0
    %362 = vmatpush1.msra.mxu0 0.0
    %363 = vmatprep.subr.mxu0 0.0
    %364 = vmatpush1.msra.mxu0 0.0
    %365 = vmatprep.subr.mxu0 0.0
    %366 = vmatpush1.msra.mxu0 0.0
    %367 = vmatprep.subr.mxu0 0.0
    %368 = vmatpush1.msra.mxu0 0.0
    %369 = vmatprep.subr.mxu0 0.0
    %370 = vmatpush1.msra.mxu0 0.0
    %371 = vmatprep.subr.mxu0 0.0
    %372 = vmatpush1.msra.mxu0 0.0
    %373 = vmatprep.subr.mxu0 0.0
    %374 = vmatpush1.msra.mxu0 0.0
    %375 = vmatprep.subr.mxu0 0.0
    %376 = vmatpush1.msra.mxu0 0.0
    %377 = vmatprep.subr.mxu0 0.0
    %378 = vmatpush1.msra.mxu0 0.0
    %379 = vmatprep.subr.mxu0 0.0
    %380 = vmatpush1.msra.mxu0 0.0
    %381 = vmatprep.subr.mxu0 0.0
    %382 = vmatpush1.msra.mxu0 0.0
    %383 = vmatprep.subr.mxu0 0.0
    %384 = vmatpush1.msra.mxu0 0.0
    %385 = vmatprep.subr.mxu0 0.0
    %386 = vmatpush1.msra.mxu0 0.0
    %387 = vmatprep.subr.mxu0 %v355
    %388 = vmatpush1.msra.mxu0 %v352
    %389 = vmatprep.subr.mxu0 0.0
    %390 = vmatpush2.msra.mxu0 0.0
    %391 = vmatprep.subr.mxu0 0.0
    %392 = vmatpush2.msra.mxu0 0.0
    %393 = vmatprep.subr.mxu0 0.0
    %394 = vmatpush2.msra.mxu0 0.0
    %395 = vmatprep.subr.mxu0 0.0
    %396 = vmatpush2.msra.mxu0 0.0
    %397 = vmatprep.subr.mxu0 0.0
    %398 = vmatpush2.msra.mxu0 0.0
    %399 = vmatprep.subr.mxu0 0.0
    %400 = vmatpush2.msra.mxu0 0.0
    %401 = vmatprep.subr.mxu0 0.0
    %402 = vmatpush2.msra.mxu0 0.0
    %403 = vmatprep.subr.mxu0 0.0
    %404 = vmatpush2.msra.mxu0 0.0
    %405 = vmatprep.subr.mxu0 0.0
    %406 = vmatpush2.msra.mxu0 0.0
    %407 = vmatprep.subr.mxu0 0.0
    %408 = vmatpush2.msra.mxu0 0.0
    %409 = vmatprep.subr.mxu0 0.0
    %410 = vmatpush2.msra.mxu0 0.0
    %411 = vmatprep.subr.mxu0 0.0
    %412 = vmatpush2.msra.mxu0 0.0
    %413 = vmatprep.subr.mxu0 0.0
    %414 = vmatpush2.msra.mxu0 0.0
    %415 = vmatprep.subr.mxu0 0.0
    %416 = vmatpush2.msra.mxu0 0.0
    %417 = vmatprep.subr.mxu0 0.0
    %418 = vmatpush2.msra.mxu0 0.0
    %419 = vmatprep.subr.mxu0 0.0
    %420 = vmatpush2.msra.mxu0 0.0
    %421 = vmatprep.mubr.f32.mxu0 0.0
    %422 = vmatmul.mubr.f32.gmra.mxu0 %v348
    %v423 = vpop.f32.mrf.mxu0
    %v424 = vadd.f32 0.0, %v423
    %v425 = vpop.f32.mrf.mxu0
    %v426 = vadd.f32 0.0, %v425
    %427 = vdwg.mxu0
    %v428 = vadd.f32 %v242, %v424
    %v429 = vadd.f32 %v244, %v426
    %v430 = vmax.f32 %v428, 0.0
    %v431 = vmax.f32 %v429, 0.0
    %v432 = vld [vmem:[%s6] sm:$0xff]
    %v433 = vld [vmem:[%s6 + $0x8] sm:$0xff]
    %v434 = vld [vmem:[%s6 + $0x10] sm:$0xff]
    %v435 = vld [vmem:[%s6 + $0x18] sm:$0xff]
    %v436 = vld [vmem:[%s6 + $0x20] sm:$0xff]
    %v437 = vld [vmem:[%s6 + $0x28] sm:$0xff]
    %v438 = vld [vmem:[%s6 + $0x30] sm:$0xff]
    %v439 = vld [vmem:[%s6 + $0x38] sm:$0xff]
    %v440 = vld [vmem:[%s6 + $0x40] sm:$0xff]
    %v441 = vld [vmem:[%s6 + $0x48] sm:$0xff]
    %v442 = vld [vmem:[%s6 + $0x50] sm:$0xff]
    %v443 = vld [vmem:[%s6 + $0x58] sm:$0xff]
    %v444 = vld [vmem:[%s6 + $0x60] sm:$0xff]
    %v445 = vld [vmem:[%s6 + $0x68] sm:$0xff]
    %v446 = vld [vmem:[%s6 + $0x70] sm:$0xff]
    %v447 = vld [vmem:[%s6 + $0x78] sm:$0xff]
    %v448 = vld [vmem:[%s6 + $0x80] sm:$0xff]
    %v449 = vld [vmem:[%s6 + $0x88] sm:$0xff]
    %v450 = vld [vmem:[%s6 + $0x90] sm:$0xff]
    %v451 = vld [vmem:[%s6 + $0x98] sm:$0xff]
    %v452 = vld [vmem:[%s6 + $0xa0] sm:$0xff]
    %v453 = vld [vmem:[%s6 + $0xa8] sm:$0xff]
    %v454 = vld [vmem:[%s6 + $0xb0] sm:$0xff]
    %v455 = vld [vmem:[%s6 + $0xb8] sm:$0xff]
    %v456 = vld [vmem:[%s6 + $0xc0] sm:$0xff]
    %v457 = vld [vmem:[%s6 + $0xc8] sm:$0xff]
    %v458 = vld [vmem:[%s6 + $0xd0] sm:$0xff]
    %v459 = vld [vmem:[%s6 + $0xd8] sm:$0xff]
    %v460 = vld [vmem:[%s6 + $0xe0] sm:$0xff]
    %v461 = vld [vmem:[%s6 + $0xe8] sm:$0xff]
    %v462 = vld [vmem:[%s6 + $0xf0] sm:$0xff]
    %v463 = vld [vmem:[%s6 + $0xf8] sm:$0xff]
    %v464 = vld [vmem:[%s6 + $0x100] sm:$0xff]
    %v465 = vld [vmem:[%s6 + $0x108] sm:$0xff]
    %v466 = vld [vmem:[%s6 + $0x110] sm:$0xff]
    %v467 = vld [vmem:[%s6 + $0x118] sm:$0xff]
    %v468 = vld [vmem:[%s6 + $0x120] sm:$0xff]
    %v469 = vld [vmem:[%s6 + $0x128] sm:$0xff]
    %v470 = vld [vmem:[%s6 + $0x130] sm:$0xff]
    %v471 = vld [vmem:[%s6 + $0x138] sm:$0xff]
    %v472 = vld [vmem:[%s6 + $0x140] sm:$0xff]
    %v473 = vld [vmem:[%s6 + $0x148] sm:$0xff]
    %v474 = vld [vmem:[%s6 + $0x150] sm:$0xff]
    %v475 = vld [vmem:[%s6 + $0x158] sm:$0xff]
    %v476 = vld [vmem:[%s6 + $0x160] sm:$0xff]
    %v477 = vld [vmem:[%s6 + $0x168] sm:$0xff]
    %v478 = vld [vmem:[%s6 + $0x170] sm:$0xff]
    %v479 = vld [vmem:[%s6 + $0x178] sm:$0xff]
    %v480 = vld [vmem:[%s6 + $0x180] sm:$0xff]
    %v481 = vld [vmem:[%s6 + $0x188] sm:$0xff]
    %v482 = vld [vmem:[%s7] sm:$0x3]
    %v484 = vlaneseq
    %v485 = vshrl.u32 %v484, 7
    %v486 = vsub.s32 0, %v485
    %v487 = vrot.slane %v482, %v486
    %v488 = vlaneseq
    %v489 = vshrl.u32 %v488, 7
    %v490 = vsub.s32 1, %v489
    %v491 = vrot.slane %v482, %v490
    %vm494 = vcmask 588800
    %v496 = vsel %vm494, %v431, 0
    %498 = vmatprep.subr.mxu0 %v463
    %499 = vmatpush1.msra.mxu0 %v462
    %500 = vmatprep.subr.mxu0 %v461
    %501 = vmatpush1.msra.mxu0 %v460
    %502 = vmatprep.subr.mxu0 %v459
    %503 = vmatpush1.msra.mxu0 %v458
    %504 = vmatprep.subr.mxu0 %v457
    %505 = vmatpush1.msra.mxu0 %v456
    %506 = vmatprep.subr.mxu0 %v455
    %507 = vmatpush1.msra.mxu0 %v454
    %508 = vmatprep.subr.mxu0 %v453
    %509 = vmatpush1.msra.mxu0 %v452
    %510 = vmatprep.subr.mxu0 %v451
    %511 = vmatpush1.msra.mxu0 %v450
    %512 = vmatprep.subr.mxu0 %v449
    %513 = vmatpush1.msra.mxu0 %v448
    %514 = vmatprep.subr.mxu0 %v447
    %515 = vmatpush1.msra.mxu0 %v446
    %516 = vmatprep.subr.mxu0 %v445
    %517 = vmatpush1.msra.mxu0 %v444
    %518 = vmatprep.subr.mxu0 %v443
    %519 = vmatpush1.msra.mxu0 %v442
    %520 = vmatprep.subr.mxu0 %v441
    %521 = vmatpush1.msra.mxu0 %v440
    %522 = vmatprep.subr.mxu0 %v439
    %523 = vmatpush1.msra.mxu0 %v438
    %524 = vmatprep.subr.mxu0 %v437
    %525 = vmatpush1.msra.mxu0 %v436
    %526 = vmatprep.subr.mxu0 %v435
    %527 = vmatpush1.msra.mxu0 %v434
    %528 = vmatprep.subr.mxu0 %v433
    %529 = vmatpush1.msra.mxu0 %v432
    %530 = vmatprep.subr.mxu0 0.0
    %531 = vmatpush2.msra.mxu0 0.0
    %532 = vmatprep.subr.mxu0 0.0
    %533 = vmatpush2.msra.mxu0 0.0
    %534 = vmatprep.subr.mxu0 0.0
    %535 = vmatpush2.msra.mxu0 0.0
    %536 = vmatprep.subr.mxu0 0.0
    %537 = vmatpush2.msra.mxu0 0.0
    %538 = vmatprep.subr.mxu0 0.0
    %539 = vmatpush2.msra.mxu0 0.0
    %540 = vmatprep.subr.mxu0 0.0
    %541 = vmatpush2.msra.mxu0 0.0
    %542 = vmatprep.subr.mxu0 0.0
    %543 = vmatpush2.msra.mxu0 0.0
    %544 = vmatprep.subr.mxu0 %v481
    %545 = vmatpush2.msra.mxu0 %v480
    %546 = vmatprep.subr.mxu0 %v479
    %547 = vmatpush2.msra.mxu0 %v478
    %548 = vmatprep.subr.mxu0 %v477
    %549 = vmatpush2.msra.mxu0 %v476
    %550 = vmatprep.subr.mxu0 %v475
    %551 = vmatpush2.msra.mxu0 %v474
    %552 = vmatprep.subr.mxu0 %v473
    %553 = vmatpush2.msra.mxu0 %v472
    %554 = vmatprep.subr.mxu0 %v471
    %555 = vmatpush2.msra.mxu0 %v470
    %556 = vmatprep.subr.mxu0 %v469
    %557 = vmatpush2.msra.mxu0 %v468
    %558 = vmatprep.subr.mxu0 %v467
    %559 = vmatpush2.msra.mxu0 %v466
    %560 = vmatprep.subr.mxu0 %v465
    %561 = vmatpush2.msra.mxu0 %v464
    %562 = vmatprep.mubr.f32.mxu0 %v496
    %563 = vmatmul.mubr.f32.gmra.mxu0 %v430
    %v564 = vpop.f32.mrf.mxu0
    %v565 = vadd.f32 %v487, %v564
    %v566 = vpop.f32.mrf.mxu0
    %v567 = vadd.f32 %v491, %v566
    %568 = vdwg.mxu0
    %v569 = vmax.f32 %v565, 0.0
    %v570 = vmax.f32 %v567, 0.0
    %v571 = vld [vmem:[%s8] sm:$0xff]
    %v572 = vld [vmem:[%s8 + $0x8] sm:$0xff]
    %v573 = vld [vmem:[%s8 + $0x10] sm:$0xff]
    %v574 = vld [vmem:[%s8 + $0x18] sm:$0xff]
    %v575 = vld [vmem:[%s8 + $0x20] sm:$0xff]
    %v576 = vld [vmem:[%s8 + $0x28] sm:$0xff]
    %v577 = vld [vmem:[%s8 + $0x30] sm:$0xff]
    %v578 = vld [vmem:[%s8 + $0x38] sm:$0xff]
    %v579 = vld [vmem:[%s8 + $0x40] sm:$0xff]
    %v580 = vld [vmem:[%s8 + $0x48] sm:$0xff]
    %v581 = vld [vmem:[%s8 + $0x50] sm:$0xff]
    %v582 = vld [vmem:[%s8 + $0x58] sm:$0xff]
    %v583 = vld [vmem:[%s8 + $0x60] sm:$0xff]
    %v584 = vld [vmem:[%s8 + $0x68] sm:$0xff]
    %v585 = vld [vmem:[%s8 + $0x70] sm:$0xff]
    %v586 = vld [vmem:[%s8 + $0x78] sm:$0xff]
    %v587 = vld [vmem:[%s8 + $0x80] sm:$0xff]
    %v588 = vld [vmem:[%s8 + $0x88] sm:$0xff]
    %v589 = vld [vmem:[%s8 + $0x90] sm:$0xff]
    %v590 = vld [vmem:[%s8 + $0x98] sm:$0xff]
    %v591 = vld [vmem:[%s8 + $0xa0] sm:$0xff]
    %v592 = vld [vmem:[%s8 + $0xa8] sm:$0xff]
    %v593 = vld [vmem:[%s8 + $0xb0] sm:$0xff]
    %v594 = vld [vmem:[%s8 + $0xb8] sm:$0xff]
    %v595 = vld [vmem:[%s8 + $0xc0] sm:$0xff]
    %v596 = vld [vmem:[#allocation10] sm:$0x1]
    %v598 = vlaneseq
    %v599 = vshrl.u32 %v598, 7
    %v600 = vsub.s32 0, %v599
    %v601 = vrot.slane %v596, %v600
    %v604 = vsel %vm494, %v570, 0
    %606 = vmatprep.subr.mxu0 0.0
    %607 = vmatpush1.msra.mxu0 %v586
    %608 = vmatprep.subr.mxu0 0.0
    %609 = vmatpush1.msra.mxu0 %v585
    %610 = vmatprep.subr.mxu0 0.0
    %611 = vmatpush1.msra.mxu0 %v584
    %612 = vmatprep.subr.mxu0 0.0
    %613 = vmatpush1.msra.mxu0 %v583
    %614 = vmatprep.subr.mxu0 0.0
    %615 = vmatpush1.msra.mxu0 %v582
    %616 = vmatprep.subr.mxu0 0.0
    %617 = vmatpush1.msra.mxu0 %v581
    %618 = vmatprep.subr.mxu0 0.0
    %619 = vmatpush1.msra.mxu0 %v580
    %620 = vmatprep.subr.mxu0 0.0
    %621 = vmatpush1.msra.mxu0 %v579
    %622 = vmatprep.subr.mxu0 0.0
    %623 = vmatpush1.msra.mxu0 %v578
    %624 = vmatprep.subr.mxu0 0.0
    %625 = vmatpush1.msra.mxu0 %v577
    %626 = vmatprep.subr.mxu0 0.0
    %627 = vmatpush1.msra.mxu0 %v576
    %628 = vmatprep.subr.mxu0 0.0
    %629 = vmatpush1.msra.mxu0 %v575
    %630 = vmatprep.subr.mxu0 0.0
    %631 = vmatpush1.msra.mxu0 %v574
    %632 = vmatprep.subr.mxu0 0.0
    %633 = vmatpush1.msra.mxu0 %v573
    %634 = vmatprep.subr.mxu0 0.0
    %635 = vmatpush1.msra.mxu0 %v572
    %636 = vmatprep.subr.mxu0 0.0
    %637 = vmatpush1.msra.mxu0 %v571
    %638 = vmatprep.subr.mxu0 0.0
    %639 = vmatpush2.msra.mxu0 0.0
    %640 = vmatprep.subr.mxu0 0.0
    %641 = vmatpush2.msra.mxu0 0.0
    %642 = vmatprep.subr.mxu0 0.0
    %643 = vmatpush2.msra.mxu0 0.0
    %644 = vmatprep.subr.mxu0 0.0
    %645 = vmatpush2.msra.mxu0 0.0
    %646 = vmatprep.subr.mxu0 0.0
    %647 = vmatpush2.msra.mxu0 0.0
    %648 = vmatprep.subr.mxu0 0.0
    %649 = vmatpush2.msra.mxu0 0.0
    %650 = vmatprep.subr.mxu0 0.0
    %651 = vmatpush2.msra.mxu0 0.0
    %652 = vmatprep.subr.mxu0 0.0
    %653 = vmatpush2.msra.mxu0 %v595
    %654 = vmatprep.subr.mxu0 0.0
    %655 = vmatpush2.msra.mxu0 %v594
    %656 = vmatprep.subr.mxu0 0.0
    %657 = vmatpush2.msra.mxu0 %v593
    %658 = vmatprep.subr.mxu0 0.0
    %659 = vmatpush2.msra.mxu0 %v592
    %660 = vmatprep.subr.mxu0 0.0
    %661 = vmatpush2.msra.mxu0 %v591
    %662 = vmatprep.subr.mxu0 0.0
    %663 = vmatpush2.msra.mxu0 %v590
    %664 = vmatprep.subr.mxu0 0.0
    %665 = vmatpush2.msra.mxu0 %v589
    %666 = vmatprep.subr.mxu0 0.0
    %667 = vmatpush2.msra.mxu0 %v588
    %668 = vmatprep.subr.mxu0 0.0
    %669 = vmatpush2.msra.mxu0 %v587
    %670 = vmatprep.mubr.f32.mxu0 %v604
    %671 = vmatmul.mubr.f32.gmra.mxu0 %v569
    %v672 = vpop.f32.mrf.mxu0
    %v673 = vadd.f32 %v601, %v672
    %v674 = vpop.f32.mrf.mxu0
    %675 = vdwg.mxu0
    %v676 = vld [vmem:[#allocation2] sm:$0xff]
    %v677 = vld [vmem:[%s11] sm:$0xff]
    %v678 = vld [vmem:[%s11 + $0x8] sm:$0xff]
    %v679 = vld [vmem:[%s11 + $0x10] sm:$0x3f]
    %v680 = vld [vmem:[%s11 + $0x18] sm:$0x3f]
    %vm681 = vcmask 113664
    %v683 = vsel %vm681, %v676, 0
    %v686 = vsel %vm681, %v673, 0
    %vm688 = vcmask 1045504
    %v690 = vsel %vm688, %v679, 0
    %v693 = vsel %vm688, %v680, 0
    %695 = vmatprep.subr.mxu0 0.0
    %696 = vmatpush1.msra.mxu0 0.0
    %697 = vmatprep.subr.mxu0 0.0
    %698 = vmatpush1.msra.mxu0 0.0
    %699 = vmatprep.subr.mxu0 0.0
    %700 = vmatpush1.msra.mxu0 0.0
    %701 = vmatprep.subr.mxu0 0.0
    %702 = vmatpush1.msra.mxu0 0.0
    %703 = vmatprep.subr.mxu0 0.0
    %704 = vmatpush1.msra.mxu0 0.0
    %705 = vmatprep.subr.mxu0 0.0
    %706 = vmatpush1.msra.mxu0 0.0
    %707 = vmatprep.subr.mxu0 0.0
    %708 = vmatpush1.msra.mxu0 0.0
    %709 = vmatprep.subr.mxu0 0.0
    %710 = vmatpush1.msra.mxu0 0.0
    %711 = vmatprep.subr.mxu0 0.0
    %712 = vmatpush1.msra.mxu0 0.0
    %713 = vmatprep.subr.mxu0 0.0
    %714 = vmatpush1.msra.mxu0 0.0
    %715 = vmatprep.subr.mxu0 0.0
    %716 = vmatpush1.msra.mxu0 0.0
    %717 = vmatprep.subr.mxu0 0.0
    %718 = vmatpush1.msra.mxu0 0.0
    %719 = vmatprep.subr.mxu0 0.0
    %720 = vmatpush1.msra.mxu0 0.0
    %721 = vmatprep.subr.mxu0 0.0
    %722 = vmatpush1.msra.mxu0 0.0
    %723 = vmatprep.subr.mxu0 %v693
    %724 = vmatpush1.msra.mxu0 %v690
    %725 = vmatprep.subr.mxu0 %v678
    %726 = vmatpush1.msra.mxu0 %v677
    %727 = vmatprep.subr.mxu0 0.0
    %728 = vmatpush2.msra.mxu0 0.0
    %729 = vmatprep.subr.mxu0 0.0
    %730 = vmatpush2.msra.mxu0 0.0
    %731 = vmatprep.subr.mxu0 0.0
    %732 = vmatpush2.msra.mxu0 0.0
    %733 = vmatprep.subr.mxu0 0.0
    %734 = vmatpush2.msra.mxu0 0.0
    %735 = vmatprep.subr.mxu0 0.0
    %736 = vmatpush2.msra.mxu0 0.0
    %737 = vmatprep.subr.mxu0 0.0
    %738 = vmatpush2.msra.mxu0 0.0
    %739 = vmatprep.subr.mxu0 0.0
    %740 = vmatpush2.msra.mxu0 0.0
    %741 = vmatprep.subr.mxu0 0.0
    %742 = vmatpush2.msra.mxu0 0.0
    %743 = vmatprep.subr.mxu0 0.0
    %744 = vmatpush2.msra.mxu0 0.0
    %745 = vmatprep.subr.mxu0 0.0
    %746 = vmatpush2.msra.mxu0 0.0
    %747 = vmatprep.subr.mxu0 0.0
    %748 = vmatpush2.msra.mxu0 0.0
    %749 = vmatprep.subr.mxu0 0.0
    %750 = vmatpush2.msra.mxu0 0.0
    %751 = vmatprep.subr.mxu0 0.0
    %752 = vmatpush2.msra.mxu0 0.0
    %753 = vmatprep.subr.mxu0 0.0
    %754 = vmatpush2.msra.mxu0 0.0
    %755 = vmatprep.subr.mxu0 0.0
    %756 = vmatpush2.msra.mxu0 0.0
    %757 = vmatprep.subr.mxu0 0.0
    %758 = vmatpush2.msra.mxu0 0.0
    %759 = vmatprep.mubr.f32.mxu0 0.0
    %760 = vmatmul.mubr.f32.gmra.mxu0 %v683
    %v761 = vpop.f32.mrf.mxu0
    %v762 = vadd.f32 0.0, %v761
    %v763 = vpop.f32.mrf.mxu0
    %v764 = vadd.f32 0.0, %v763
    %765 = vmatprep.mubr.f32.mxu0 0.0
    %766 = vmatmul.mubr.f32.gmra.mxu0 %v686
    %v767 = vpop.f32.mrf.mxu0
    %v768 = vadd.f32 0.0, %v767
    %v769 = vpop.f32.mrf.mxu0
    %v770 = vadd.f32 0.0, %v769
    %771 = vdwg.mxu0
    %v772 = vadd.f32 %v762, %v339
    %v773 = vadd.f32 %v764, %v341
    %v774 = vadd.f32 %v768, %v339
    %v775 = vadd.f32 %v770, %v341
    %v776 = vmax.f32 %v772, 0.0
    %v777 = vmax.f32 %v773, 0.0
    %v778 = vmax.f32 %v774, 0.0
    %v779 = vmax.f32 %v775, 0.0
    %v780 = vld [vmem:[#allocation13] sm:$0xff]
    %v781 = vld [vmem:[#allocation13 + $0x8] sm:$0xff]
    %v782 = vld [vmem:[#allocation13 + $0x10] sm:$0xff]
    %v783 = vld [vmem:[#allocation13 + $0x18] sm:$0xff]
    %v784 = vld [vmem:[#allocation13 + $0x20] sm:$0xff]
    %v785 = vld [vmem:[#allocation13 + $0x28] sm:$0xff]
    %v786 = vld [vmem:[#allocation13 + $0x30] sm:$0xff]
    %v787 = vld [vmem:[#allocation13 + $0x38] sm:$0xff]
    %v788 = vld [vmem:[#allocation13 + $0x40] sm:$0xff]
    %v789 = vld [vmem:[#allocation13 + $0x48] sm:$0xff]
    %v790 = vld [vmem:[#allocation13 + $0x50] sm:$0xff]
    %v791 = vld [vmem:[#allocation13 + $0x58] sm:$0xff]
    %v792 = vld [vmem:[#allocation13 + $0x60] sm:$0xff]
    %v793 = vld [vmem:[#allocation13 + $0x68] sm:$0xff]
    %v794 = vld [vmem:[#allocation13 + $0x70] sm:$0xff]
    %v795 = vld [vmem:[#allocation13 + $0x78] sm:$0xff]
    %v796 = vld [vmem:[#allocation13 + $0x80] sm:$0xff]
    %v797 = vld [vmem:[#allocation13 + $0x88] sm:$0xff]
    %v798 = vld [vmem:[#allocation13 + $0x90] sm:$0xff]
    %v799 = vld [vmem:[#allocation13 + $0x98] sm:$0xff]
    %v800 = vld [vmem:[#allocation13 + $0xa0] sm:$0xff]
    %v801 = vld [vmem:[#allocation13 + $0xa8] sm:$0xff]
    %v802 = vld [vmem:[#allocation13 + $0xb0] sm:$0xff]
    %v803 = vld [vmem:[#allocation13 + $0xb8] sm:$0xff]
    %v804 = vld [vmem:[#allocation13 + $0xc0] sm:$0xff]
    %v805 = vld [vmem:[#allocation13 + $0xc8] sm:$0xff]
    %v806 = vld [vmem:[#allocation13 + $0xd0] sm:$0xff]
    %v807 = vld [vmem:[#allocation13 + $0xd8] sm:$0xff]
    %v808 = vld [vmem:[#allocation13 + $0xe0] sm:$0xff]
    %v809 = vld [vmem:[#allocation13 + $0xe8] sm:$0xff]
    %v810 = vld [vmem:[#allocation13 + $0xf0] sm:$0xff]
    %v811 = vld [vmem:[#allocation13 + $0xf8] sm:$0xff]
    %v812 = vld [vmem:[#allocation13 + $0x100] sm:$0xff]
    %v813 = vld [vmem:[#allocation13 + $0x108] sm:$0xff]
    %v814 = vld [vmem:[#allocation13 + $0x110] sm:$0xff]
    %v815 = vld [vmem:[#allocation13 + $0x118] sm:$0xff]
    %v816 = vld [vmem:[#allocation13 + $0x120] sm:$0xff]
    %v817 = vld [vmem:[#allocation13 + $0x128] sm:$0xff]
    %v818 = vld [vmem:[#allocation13 + $0x130] sm:$0xff]
    %v819 = vld [vmem:[#allocation13 + $0x138] sm:$0xff]
    %v820 = vld [vmem:[#allocation13 + $0x140] sm:$0xff]
    %v821 = vld [vmem:[#allocation13 + $0x148] sm:$0xff]
    %v822 = vld [vmem:[#allocation13 + $0x150] sm:$0xff]
    %v823 = vld [vmem:[#allocation13 + $0x158] sm:$0xff]
    %v824 = vld [vmem:[#allocation13 + $0x160] sm:$0xff]
    %v825 = vld [vmem:[#allocation13 + $0x168] sm:$0xff]
    %v826 = vld [vmem:[#allocation13 + $0x170] sm:$0xff]
    %v827 = vld [vmem:[#allocation13 + $0x178] sm:$0xff]
    %v828 = vld [vmem:[#allocation13 + $0x180] sm:$0xff]
    %v829 = vld [vmem:[#allocation13 + $0x188] sm:$0xff]
    %v830 = vld [vmem:[%s14] sm:$0x3]
    %v832 = vlaneseq
    %v833 = vshrl.u32 %v832, 7
    %v834 = vsub.s32 0, %v833
    %v835 = vrot.slane %v830, %v834
    %v836 = vlaneseq
    %v837 = vshrl.u32 %v836, 7
    %v838 = vsub.s32 1, %v837
    %v839 = vrot.slane %v830, %v838
    %v843 = vsel %vm494, %v777, 0
    %v846 = vsel %vm494, %v779, 0
    %848 = vmatprep.subr.mxu0 %v811
    %849 = vmatpush1.msra.mxu0 %v810
    %850 = vmatprep.subr.mxu0 %v809
    %851 = vmatpush1.msra.mxu0 %v808
    %852 = vmatprep.subr.mxu0 %v807
    %853 = vmatpush1.msra.mxu0 %v806
    %854 = vmatprep.subr.mxu0 %v805
    %855 = vmatpush1.msra.mxu0 %v804
    %856 = vmatprep.subr.mxu0 %v803
    %857 = vmatpush1.msra.mxu0 %v802
    %858 = vmatprep.subr.mxu0 %v801
    %859 = vmatpush1.msra.mxu0 %v800
    %860 = vmatprep.subr.mxu0 %v799
    %861 = vmatpush1.msra.mxu0 %v798
    %862 = vmatprep.subr.mxu0 %v797
    %863 = vmatpush1.msra.mxu0 %v796
    %864 = vmatprep.subr.mxu0 %v795
    %865 = vmatpush1.msra.mxu0 %v794
    %866 = vmatprep.subr.mxu0 %v793
    %867 = vmatpush1.msra.mxu0 %v792
    %868 = vmatprep.subr.mxu0 %v791
    %869 = vmatpush1.msra.mxu0 %v790
    %870 = vmatprep.subr.mxu0 %v789
    %871 = vmatpush1.msra.mxu0 %v788
    %872 = vmatprep.subr.mxu0 %v787
    %873 = vmatpush1.msra.mxu0 %v786
    %874 = vmatprep.subr.mxu0 %v785
    %875 = vmatpush1.msra.mxu0 %v784
    %876 = vmatprep.subr.mxu0 %v783
    %877 = vmatpush1.msra.mxu0 %v782
    %878 = vmatprep.subr.mxu0 %v781
    %879 = vmatpush1.msra.mxu0 %v780
    %880 = vmatprep.subr.mxu0 0.0
    %881 = vmatpush2.msra.mxu0 0.0
    %882 = vmatprep.subr.mxu0 0.0
    %883 = vmatpush2.msra.mxu0 0.0
    %884 = vmatprep.subr.mxu0 0.0
    %885 = vmatpush2.msra.mxu0 0.0
    %886 = vmatprep.subr.mxu0 0.0
    %887 = vmatpush2.msra.mxu0 0.0
    %888 = vmatprep.subr.mxu0 0.0
    %889 = vmatpush2.msra.mxu0 0.0
    %890 = vmatprep.subr.mxu0 0.0
    %891 = vmatpush2.msra.mxu0 0.0
    %892 = vmatprep.subr.mxu0 0.0
    %893 = vmatpush2.msra.mxu0 0.0
    %894 = vmatprep.subr.mxu0 %v829
    %895 = vmatpush2.msra.mxu0 %v828
    %896 = vmatprep.subr.mxu0 %v827
    %897 = vmatpush2.msra.mxu0 %v826
    %898 = vmatprep.subr.mxu0 %v825
    %899 = vmatpush2.msra.mxu0 %v824
    %900 = vmatprep.subr.mxu0 %v823
    %901 = vmatpush2.msra.mxu0 %v822
    %902 = vmatprep.subr.mxu0 %v821
    %903 = vmatpush2.msra.mxu0 %v820
    %904 = vmatprep.subr.mxu0 %v819
    %905 = vmatpush2.msra.mxu0 %v818
    %906 = vmatprep.subr.mxu0 %v817
    %907 = vmatpush2.msra.mxu0 %v816
    %908 = vmatprep.subr.mxu0 %v815
    %909 = vmatpush2.msra.mxu0 %v814
    %910 = vmatprep.subr.mxu0 %v813
    %911 = vmatpush2.msra.mxu0 %v812
    %912 = vmatprep.mubr.f32.mxu0 %v843
    %913 = vmatmul.mubr.f32.gmra.mxu0 %v776
    %v914 = vpop.f32.mrf.mxu0
    %v915 = vadd.f32 %v835, %v914
    %v916 = vpop.f32.mrf.mxu0
    %v917 = vadd.f32 %v839, %v916
    %918 = vmatprep.mubr.f32.mxu0 %v846
    %919 = vmatmul.mubr.f32.gmra.mxu0 %v778
    %v920 = vpop.f32.mrf.mxu0
    %v921 = vadd.f32 %v835, %v920
    %v922 = vpop.f32.mrf.mxu0
    %v923 = vadd.f32 %v839, %v922
    %924 = vdwg.mxu0
    %v925 = vmax.f32 %v915, 0.0
    %v926 = vmax.f32 %v917, 0.0
    %v927 = vmax.f32 %v921, 0.0
    %v928 = vmax.f32 %v923, 0.0
    %v929 = vld [vmem:[%s15] sm:$0xff]
    %v930 = vld [vmem:[%s15 + $0x8] sm:$0xff]
    %v931 = vld [vmem:[%s15 + $0x10] sm:$0xff]
    %v932 = vld [vmem:[%s15 + $0x18] sm:$0xff]
    %v933 = vld [vmem:[%s15 + $0x20] sm:$0xff]
    %v934 = vld [vmem:[%s15 + $0x28] sm:$0xff]
    %v935 = vld [vmem:[%s15 + $0x30] sm:$0xff]
    %v936 = vld [vmem:[%s15 + $0x38] sm:$0xff]
    %v937 = vld [vmem:[%s15 + $0x40] sm:$0xff]
    %v938 = vld [vmem:[%s15 + $0x48] sm:$0xff]
    %v939 = vld [vmem:[%s15 + $0x50] sm:$0xff]
    %v940 = vld [vmem:[%s15 + $0x58] sm:$0xff]
    %v941 = vld [vmem:[%s15 + $0x60] sm:$0xff]
    %v942 = vld [vmem:[%s15 + $0x68] sm:$0xff]
    %v943 = vld [vmem:[%s15 + $0x70] sm:$0xff]
    %v944 = vld [vmem:[%s15 + $0x78] sm:$0xff]
    %v945 = vld [vmem:[%s15 + $0x80] sm:$0xff]
    %v946 = vld [vmem:[%s15 + $0x88] sm:$0xff]
    %v947 = vld [vmem:[%s15 + $0x90] sm:$0xff]
    %v948 = vld [vmem:[%s15 + $0x98] sm:$0xff]
    %v949 = vld [vmem:[%s15 + $0xa0] sm:$0xff]
    %v950 = vld [vmem:[%s15 + $0xa8] sm:$0xff]
    %v951 = vld [vmem:[%s15 + $0xb0] sm:$0xff]
    %v952 = vld [vmem:[%s15 + $0xb8] sm:$0xff]
    %v953 = vld [vmem:[%s15 + $0xc0] sm:$0xff]
    %v954 = vld [vmem:[%s16] sm:$0x1]
    %v956 = vlaneseq
    %v957 = vshrl.u32 %v956, 7
    %v958 = vsub.s32 0, %v957
    %v959 = vrot.slane %v954, %v958
    %v962 = vsel %vm494, %v926, 0
    %v965 = vsel %vm494, %v928, 0
    %967 = vmatprep.subr.mxu0 0.0
    %968 = vmatpush1.msra.mxu0 %v944
    %969 = vmatprep.subr.mxu0 0.0
    %970 = vmatpush1.msra.mxu0 %v943
    %971 = vmatprep.subr.mxu0 0.0
    %972 = vmatpush1.msra.mxu0 %v942
    %973 = vmatprep.subr.mxu0 0.0
    %974 = vmatpush1.msra.mxu0 %v941
    %975 = vmatprep.subr.mxu0 0.0
    %976 = vmatpush1.msra.mxu0 %v940
    %977 = vmatprep.subr.mxu0 0.0
    %978 = vmatpush1.msra.mxu0 %v939
    %979 = vmatprep.subr.mxu0 0.0
    %980 = vmatpush1.msra.mxu0 %v938
    %981 = vmatprep.subr.mxu0 0.0
    %982 = vmatpush1.msra.mxu0 %v937
    %983 = vmatprep.subr.mxu0 0.0
    %984 = vmatpush1.msra.mxu0 %v936
    %985 = vmatprep.subr.mxu0 0.0
    %986 = vmatpush1.msra.mxu0 %v935
    %987 = vmatprep.subr.mxu0 0.0
    %988 = vmatpush1.msra.mxu0 %v934
    %989 = vmatprep.subr.mxu0 0.0
    %990 = vmatpush1.msra.mxu0 %v933
    %991 = vmatprep.subr.mxu0 0.0
    %992 = vmatpush1.msra.mxu0 %v932
    %993 = vmatprep.subr.mxu0 0.0
    %994 = vmatpush1.msra.mxu0 %v931
    %995 = vmatprep.subr.mxu0 0.0
    %996 = vmatpush1.msra.mxu0 %v930
    %997 = vmatprep.subr.mxu0 0.0
    %998 = vmatpush1.msra.mxu0 %v929
    %999 = vmatprep.subr.mxu0 0.0
    %1000 = vmatpush2.msra.mxu0 0.0
    %1001 = vmatprep.subr.mxu0 0.0
    %1002 = vmatpush2.msra.mxu0 0.0
    %1003 = vmatprep.subr.mxu0 0.0
    %1004 = vmatpush2.msra.mxu0 0.0
    %1005 = vmatprep.subr.mxu0 0.0
    %1006 = vmatpush2.msra.mxu0 0.0
    %1007 = vmatprep.subr.mxu0 0.0
    %1008 = vmatpush2.msra.mxu0 0.0
    %1009 = vmatprep.subr.mxu0 0.0
    %1010 = vmatpush2.msra.mxu0 0.0
    %1011 = vmatprep.subr.mxu0 0.0
    %1012 = vmatpush2.msra.mxu0 0.0
    %1013 = vmatprep.subr.mxu0 0.0
    %1014 = vmatpush2.msra.mxu0 %v953
    %1015 = vmatprep.subr.mxu0 0.0
    %1016 = vmatpush2.msra.mxu0 %v952
    %1017 = vmatprep.subr.mxu0 0.0
    %1018 = vmatpush2.msra.mxu0 %v951
    %1019 = vmatprep.subr.mxu0 0.0
    %1020 = vmatpush2.msra.mxu0 %v950
    %1021 = vmatprep.subr.mxu0 0.0
    %1022 = vmatpush2.msra.mxu0 %v949
    %1023 = vmatprep.subr.mxu0 0.0
    %1024 = vmatpush2.msra.mxu0 %v948
    %1025 = vmatprep.subr.mxu0 0.0
    %1026 = vmatpush2.msra.mxu0 %v947
    %1027 = vmatprep.subr.mxu0 0.0
    %1028 = vmatpush2.msra.mxu0 %v946
    %1029 = vmatprep.subr.mxu0 0.0
    %1030 = vmatpush2.msra.mxu0 %v945
    %1031 = vmatprep.mubr.f32.mxu0 %v962
    %1032 = vmatmul.mubr.f32.gmra.mxu0 %v925
    %v1033 = vpop.f32.mrf.mxu0
    %v1034 = vadd.f32 %v959, %v1033
    %v1035 = vpop.f32.mrf.mxu0
    %1036 = vmatprep.mubr.f32.mxu0 %v965
    %1037 = vmatmul.mubr.f32.gmra.mxu0 %v927
    %v1038 = vpop.f32.mrf.mxu0
    %v1039 = vadd.f32 %v959, %v1038
    %v1040 = vpop.f32.mrf.mxu0
    %1041 = vdwg.mxu0
    %v1043 = vsel %vm346, %v1034, 0
    %1045 = vmatprep.subr.mxu0 0.0
    %1046 = vmatpush1.msra.mxu0 0.0
    %1047 = vmatprep.subr.mxu0 0.0
    %1048 = vmatpush1.msra.mxu0 0.0
    %1049 = vmatprep.subr.mxu0 0.0
    %1050 = vmatpush1.msra.mxu0 0.0
    %1051 = vmatprep.subr.mxu0 0.0
    %1052 = vmatpush1.msra.mxu0 0.0
    %1053 = vmatprep.subr.mxu0 0.0
    %1054 = vmatpush1.msra.mxu0 0.0
    %1055 = vmatprep.subr.mxu0 0.0
    %1056 = vmatpush1.msra.mxu0 0.0
    %1057 = vmatprep.subr.mxu0 0.0
    %1058 = vmatpush1.msra.mxu0 0.0
    %1059 = vmatprep.subr.mxu0 0.0
    %1060 = vmatpush1.msra.mxu0 0.0
    %1061 = vmatprep.subr.mxu0 0.0
    %1062 = vmatpush1.msra.mxu0 0.0
    %1063 = vmatprep.subr.mxu0 0.0
    %1064 = vmatpush1.msra.mxu0 0.0
    %1065 = vmatprep.subr.mxu0 0.0
    %1066 = vmatpush1.msra.mxu0 0.0
    %1067 = vmatprep.subr.mxu0 0.0
    %1068 = vmatpush1.msra.mxu0 0.0
    %1069 = vmatprep.subr.mxu0 0.0
    %1070 = vmatpush1.msra.mxu0 0.0
    %1071 = vmatprep.subr.mxu0 0.0
    %1072 = vmatpush1.msra.mxu0 0.0
    %1073 = vmatprep.subr.mxu0 0.0
    %1074 = vmatpush1.msra.mxu0 0.0
    %1075 = vmatprep.subr.mxu0 %v355
    %1076 = vmatpush1.msra.mxu0 %v352
    %1077 = vmatprep.subr.mxu0 0.0
    %1078 = vmatpush2.msra.mxu0 0.0
    %1079 = vmatprep.subr.mxu0 0.0
    %1080 = vmatpush2.msra.mxu0 0.0
    %1081 = vmatprep.subr.mxu0 0.0
    %1082 = vmatpush2.msra.mxu0 0.0
    %1083 = vmatprep.subr.mxu0 0.0
    %1084 = vmatpush2.msra.mxu0 0.0
    %1085 = vmatprep.subr.mxu0 0.0
    %1086 = vmatpush2.msra.mxu0 0.0
    %1087 = vmatprep.subr.mxu0 0.0
    %1088 = vmatpush2.msra.mxu0 0.0
    %1089 = vmatprep.subr.mxu0 0.0
    %1090 = vmatpush2.msra.mxu0 0.0
    %1091 = vmatprep.subr.mxu0 0.0
    %1092 = vmatpush2.msra.mxu0 0.0
    %1093 = vmatprep.subr.mxu0 0.0
    %1094 = vmatpush2.msra.mxu0 0.0
    %1095 = vmatprep.subr.mxu0 0.0
    %1096 = vmatpush2.msra.mxu0 0.0
    %1097 = vmatprep.subr.mxu0 0.0
    %1098 = vmatpush2.msra.mxu0 0.0
    %1099 = vmatprep.subr.mxu0 0.0
    %1100 = vmatpush2.msra.mxu0 0.0
    %1101 = vmatprep.subr.mxu0 0.0
    %1102 = vmatpush2.msra.mxu0 0.0
    %1103 = vmatprep.subr.mxu0 0.0
    %1104 = vmatpush2.msra.mxu0 0.0
    %1105 = vmatprep.subr.mxu0 0.0
    %1106 = vmatpush2.msra.mxu0 0.0
    %1107 = vmatprep.subr.mxu0 0.0
    %1108 = vmatpush2.msra.mxu0 0.0
    %1109 = vmatprep.mubr.f32.mxu0 0.0
    %1110 = vmatmul.mubr.f32.gmra.mxu0 %v1043
    %v1111 = vpop.f32.mrf.mxu0
    %v1112 = vadd.f32 0.0, %v1111
    %v1113 = vpop.f32.mrf.mxu0
    %v1114 = vadd.f32 0.0, %v1113
    %1115 = vdwg.mxu0
    %v1116 = vadd.f32 %v242, %v1112
    %v1117 = vadd.f32 %v244, %v1114
    %v1118 = vmax.f32 %v1116, 0.0
    %v1119 = vmax.f32 %v1117, 0.0
    %v1121 = vsel %vm494, %v1119, 0
    %1123 = vmatprep.subr.mxu0 %v463
    %1124 = vmatpush1.msra.mxu0 %v462
    %1125 = vmatprep.subr.mxu0 %v461
    %1126 = vmatpush1.msra.mxu0 %v460
    %1127 = vmatprep.subr.mxu0 %v459
    %1128 = vmatpush1.msra.mxu0 %v458
    %1129 = vmatprep.subr.mxu0 %v457
    %1130 = vmatpush1.msra.mxu0 %v456
    %1131 = vmatprep.subr.mxu0 %v455
    %1132 = vmatpush1.msra.mxu0 %v454
    %1133 = vmatprep.subr.mxu0 %v453
    %1134 = vmatpush1.msra.mxu0 %v452
    %1135 = vmatprep.subr.mxu0 %v451
    %1136 = vmatpush1.msra.mxu0 %v450
    %1137 = vmatprep.subr.mxu0 %v449
    %1138 = vmatpush1.msra.mxu0 %v448
    %1139 = vmatprep.subr.mxu0 %v447
    %1140 = vmatpush1.msra.mxu0 %v446
    %1141 = vmatprep.subr.mxu0 %v445
    %1142 = vmatpush1.msra.mxu0 %v444
    %1143 = vmatprep.subr.mxu0 %v443
    %1144 = vmatpush1.msra.mxu0 %v442
    %1145 = vmatprep.subr.mxu0 %v441
    %1146 = vmatpush1.msra.mxu0 %v440
    %1147 = vmatprep.subr.mxu0 %v439
    %1148 = vmatpush1.msra.mxu0 %v438
    %1149 = vmatprep.subr.mxu0 %v437
    %1150 = vmatpush1.msra.mxu0 %v436
    %1151 = vmatprep.subr.mxu0 %v435
    %1152 = vmatpush1.msra.mxu0 %v434
    %1153 = vmatprep.subr.mxu0 %v433
    %1154 = vmatpush1.msra.mxu0 %v432
    %1155 = vmatprep.subr.mxu0 0.0
    %1156 = vmatpush2.msra.mxu0 0.0
    %1157 = vmatprep.subr.mxu0 0.0
    %1158 = vmatpush2.msra.mxu0 0.0
    %1159 = vmatprep.subr.mxu0 0.0
    %1160 = vmatpush2.msra.mxu0 0.0
    %1161 = vmatprep.subr.mxu0 0.0
    %1162 = vmatpush2.msra.mxu0 0.0
    %1163 = vmatprep.subr.mxu0 0.0
    %1164 = vmatpush2.msra.mxu0 0.0
    %1165 = vmatprep.subr.mxu0 0.0
    %1166 = vmatpush2.msra.mxu0 0.0
    %1167 = vmatprep.subr.mxu0 0.0
    %1168 = vmatpush2.msra.mxu0 0.0
    %1169 = vmatprep.subr.mxu0 %v481
    %1170 = vmatpush2.msra.mxu0 %v480
    %1171 = vmatprep.subr.mxu0 %v479
    %1172 = vmatpush2.msra.mxu0 %v478
    %1173 = vmatprep.subr.mxu0 %v477
    %1174 = vmatpush2.msra.mxu0 %v476
    %1175 = vmatprep.subr.mxu0 %v475
    %1176 = vmatpush2.msra.mxu0 %v474
    %1177 = vmatprep.subr.mxu0 %v473
    %1178 = vmatpush2.msra.mxu0 %v472
    %1179 = vmatprep.subr.mxu0 %v471
    %1180 = vmatpush2.msra.mxu0 %v470
    %1181 = vmatprep.subr.mxu0 %v469
    %1182 = vmatpush2.msra.mxu0 %v468
    %1183 = vmatprep.subr.mxu0 %v467
    %1184 = vmatpush2.msra.mxu0 %v466
    %1185 = vmatprep.subr.mxu0 %v465
    %1186 = vmatpush2.msra.mxu0 %v464
    %1187 = vmatprep.mubr.f32.mxu0 %v1121
    %1188 = vmatmul.mubr.f32.gmra.mxu0 %v1118
    %v1189 = vpop.f32.mrf.mxu0
    %v1190 = vadd.f32 %v487, %v1189
    %v1191 = vpop.f32.mrf.mxu0
    %v1192 = vadd.f32 %v491, %v1191
    %1193 = vdwg.mxu0
    %v1194 = vmax.f32 %v1190, 0.0
    %v1195 = vmax.f32 %v1192, 0.0
    %v1197 = vsel %vm494, %v1195, 0
    %1199 = vmatprep.subr.mxu0 0.0
    %1200 = vmatpush1.msra.mxu0 %v586
    %1201 = vmatprep.subr.mxu0 0.0
    %1202 = vmatpush1.msra.mxu0 %v585
    %1203 = vmatprep.subr.mxu0 0.0
    %1204 = vmatpush1.msra.mxu0 %v584
    %1205 = vmatprep.subr.mxu0 0.0
    %1206 = vmatpush1.msra.mxu0 %v583
    %1207 = vmatprep.subr.mxu0 0.0
    %1208 = vmatpush1.msra.mxu0 %v582
    %1209 = vmatprep.subr.mxu0 0.0
    %1210 = vmatpush1.msra.mxu0 %v581
    %1211 = vmatprep.subr.mxu0 0.0
    %1212 = vmatpush1.msra.mxu0 %v580
    %1213 = vmatprep.subr.mxu0 0.0
    %1214 = vmatpush1.msra.mxu0 %v579
    %1215 = vmatprep.subr.mxu0 0.0
    %1216 = vmatpush1.msra.mxu0 %v578
    %1217 = vmatprep.subr.mxu0 0.0
    %1218 = vmatpush1.msra.mxu0 %v577
    %1219 = vmatprep.subr.mxu0 0.0
    %1220 = vmatpush1.msra.mxu0 %v576
    %1221 = vmatprep.subr.mxu0 0.0
    %1222 = vmatpush1.msra.mxu0 %v575
    %1223 = vmatprep.subr.mxu0 0.0
    %1224 = vmatpush1.msra.mxu0 %v574
    %1225 = vmatprep.subr.mxu0 0.0
    %1226 = vmatpush1.msra.mxu0 %v573
    %1227 = vmatprep.subr.mxu0 0.0
    %1228 = vmatpush1.msra.mxu0 %v572
    %1229 = vmatprep.subr.mxu0 0.0
    %1230 = vmatpush1.msra.mxu0 %v571
    %1231 = vmatprep.subr.mxu0 0.0
    %1232 = vmatpush2.msra.mxu0 0.0
    %1233 = vmatprep.subr.mxu0 0.0
    %1234 = vmatpush2.msra.mxu0 0.0
    %1235 = vmatprep.subr.mxu0 0.0
    %1236 = vmatpush2.msra.mxu0 0.0
    %1237 = vmatprep.subr.mxu0 0.0
    %1238 = vmatpush2.msra.mxu0 0.0
    %1239 = vmatprep.subr.mxu0 0.0
    %1240 = vmatpush2.msra.mxu0 0.0
    %1241 = vmatprep.subr.mxu0 0.0
    %1242 = vmatpush2.msra.mxu0 0.0
    %1243 = vmatprep.subr.mxu0 0.0
    %1244 = vmatpush2.msra.mxu0 0.0
    %1245 = vmatprep.subr.mxu0 0.0
    %1246 = vmatpush2.msra.mxu0 %v595
    %1247 = vmatprep.subr.mxu0 0.0
    %1248 = vmatpush2.msra.mxu0 %v594
    %1249 = vmatprep.subr.mxu0 0.0
    %1250 = vmatpush2.msra.mxu0 %v593
    %1251 = vmatprep.subr.mxu0 0.0
    %1252 = vmatpush2.msra.mxu0 %v592
    %1253 = vmatprep.subr.mxu0 0.0
    %1254 = vmatpush2.msra.mxu0 %v591
    %1255 = vmatprep.subr.mxu0 0.0
    %1256 = vmatpush2.msra.mxu0 %v590
    %1257 = vmatprep.subr.mxu0 0.0
    %1258 = vmatpush2.msra.mxu0 %v589
    %1259 = vmatprep.subr.mxu0 0.0
    %1260 = vmatpush2.msra.mxu0 %v588
    %1261 = vmatprep.subr.mxu0 0.0
    %1262 = vmatpush2.msra.mxu0 %v587
    %1263 = vmatprep.mubr.f32.mxu0 %v1197
    %1264 = vmatmul.mubr.f32.gmra.mxu0 %v1194
    %v1265 = vpop.f32.mrf.mxu0
    %v1266 = vadd.f32 %v601, %v1265
    %v1267 = vpop.f32.mrf.mxu0
    %1268 = vdwg.mxu0
    %1269 = vrot.lane.b32.xlu0 %v1034, 14
    %v1270 = vpop.permute.xlu0 %1269
    %1273 = vrot.lane.b32.xlu0 %v1039, 21
    %v1274 = vpop.permute.xlu0 %1273
    %1277 = vrot.lane.b32.xlu0 %v1266, 28
    %v1278 = vpop.permute.xlu0 %1277
    %v1280 = vsel %vm681, %v673, %v1270
    %vm1281 = vcmask 171008
    %v1282 = vsel %vm1281, %v1280, %v1274
    %vm1283 = vcmask 228352
    %v1284 = vsel %vm1283, %v1282, %v1278
    %vm1285 = vcmask 343040
    %v1286 = vsel %vm1285, %v1284, 0.0
    %1287 = vst [vmem:[#allocation14] sm:$0xff] %v1286
    // Predicated region
    $region98: #{tpu_custom_call.1} parent=1 // pred_check
      _
    $region99: #{tpu_custom_call.1} parent=1 // pred_check_branch
      %1289 = sbr.rel (0) target = $region101
    $region100: #{tpu_custom_call.1} parent=1 // pred_region
      %s1291 = ssub.s32 128, 128
      %1292 = vsyncadd [#allocation4], %s1291
      %s1294 = sshll.u32 [#allocation14], 4
      %s1295 = int_to_ptr.vmem [resolvable:$true] %s1294
      %1297 = dma.vmem_to_hbm [thread:$0]  %s1295, 128, %s17, [#allocation4]
    $region101: #{tpu_custom_call.1} parent=1 // pred_fallthru
      _
    // Predicated region
    $region102: #{tpu_custom_call.1} parent=1 // pred_check
      _
    $region103: #{tpu_custom_call.1} parent=1 // pred_check_branch
      %1299 = sbr.rel (0) target = $region105
    $region104: #{tpu_custom_call.1} parent=1 // pred_region
      %1300 = dma.done [#allocation4], 128
    $region105: #{tpu_custom_call.1} parent=1 // pred_fallthru
      _
    %1301 = vsyncpa [#allocation3], 1
    %1302 = vsyncpa [#allocation6], 1
    %1303 = vsyncpa [#allocation9], 1
    %1304 = vsyncpa [#allocation12], 1
    %1305 = vsyncpa [#allocation4], 1

</llo_original>
